<compile_context>
chip_gen: v6e
topology: v6e:2x2x1
jax: 0.10.0
libtpu: 0.0.40
codegen_flags: <defaults>
</compile_context>

<pallas_src>
import functools

import jax
import jax.numpy as jnp
from jax.experimental import pallas as pl
from jax.experimental.pallas import tpu as pltpu

EPS = 1e-5


def _chan_reduce_matrix(wc, c):
    # r[l, k] = 1 iff lane l belongs to channel k (lane layout l = w*C + k)
    li = jax.lax.broadcasted_iota(jnp.int32, (wc, c), 0)
    ci = jax.lax.broadcasted_iota(jnp.int32, (wc, c), 1)
    return ((li % c) == ci).astype(jnp.float32)


def _chan_bcast_matrix(c, wc):
    ci = jax.lax.broadcasted_iota(jnp.int32, (c, wc), 0)
    li = jax.lax.broadcasted_iota(jnp.int32, (c, wc), 1)
    return ((li % c) == ci).astype(jnp.float32)


def _double_conv_kernel(x_ref, w1_ref, w2_ref, gb_ref, out_ref, *,
                        N, H, W, Cin, Cmid, Cout):
    # x_ref:  (N, H, W*Cin) f32     packed (w, c)-in-lanes input, no halo
    # w1_ref: (W*Cin,  3*W*Cmid) bf16   banded conv1 weights, 3 ky taps along lanes
    # w2_ref: (W*Cmid, 3*W*Cout) bf16   banded conv2 weights
    # gb_ref: (4, Cmax) f32         rows = [gamma1, beta1, gamma2, beta2]
    # out_ref:(N, H, W*Cout) f32    lane-dense output
    f32 = jnp.float32
    R = N * H
    inv_cnt = 1.0 / float(N * H * W)

    # per-row image-boundary masks (shared by both layers)
    row_h = jax.lax.broadcasted_iota(jnp.int32, (R, 1), 0) % H
    is_top = row_h == 0          # output row uses no row above
    is_bot = row_h == H - 1      # output row uses no row below

    def conv_bn_relu(lhs_bf16, w_ref, c_out, gamma, beta):
        wc = W * c_out
        # One MXU matmul for all N*H rows and all 3 ky taps (taps stacked along lanes).
        zall = jnp.dot(lhs_bf16, w_ref[...], preferred_element_type=f32)  # (R, 3*wc)
        z0 = zall[:, 0 * wc:1 * wc]   # tap ky=0: needs input row h-1
        z1 = zall[:, 1 * wc:2 * wc]   # tap ky=1: input row h
        z2 = zall[:, 2 * wc:3 * wc]   # tap ky=2: input row h+1
        zrow = jnp.zeros((1, wc), f32)
        z0s = jnp.concatenate([zrow, z0[:R - 1, :]], axis=0)   # row r <- z0[r-1]
        z2s = jnp.concatenate([z2[1:R, :], zrow], axis=0)      # row r <- z2[r+1]
        acc = (z1
               + jnp.where(is_top, 0.0, z0s)
               + jnp.where(is_bot, 0.0, z2s))                  # (R, wc) f32

        # BatchNorm (training-mode batch stats), computed once per layer.
        sums = jnp.concatenate(
            [jnp.sum(acc, axis=0, keepdims=True),
             jnp.sum(acc * acc, axis=0, keepdims=True)], axis=0)         # (2, wc)
        r = _chan_reduce_matrix(wc, c_out)
        stats = jnp.dot(sums, r, preferred_element_type=f32)             # (2, c_out)
        mean = stats[0:1, :] * inv_cnt
        var = jnp.maximum(stats[1:2, :] * inv_cnt - mean * mean, 0.0)    # clamp >= 0
        sc = gamma * jax.lax.rsqrt(var + EPS)                            # (1, c_out)
        sh = beta - mean * sc
        rt = _chan_bcast_matrix(c_out, wc)
        scsh = jnp.dot(jnp.concatenate([sc, sh], axis=0), rt,
                       preferred_element_type=f32)                       # (2, wc)
        return jnp.maximum(acc * scsh[0:1, :] + scsh[1:2, :], 0.0)       # (R, wc)

    g1 = gb_ref[0:1, :Cmid]
    b1 = gb_ref[1:2, :Cmid]
    g2 = gb_ref[2:3, :Cout]
    b2 = gb_ref[3:4, :Cout]

    xb = x_ref[...].reshape(R, W * Cin).astype(jnp.bfloat16)
    y1 = conv_bn_relu(xb, w1_ref, Cmid, g1, b1)                    # (R, W*Cmid) f32
    y2 = conv_bn_relu(y1.astype(jnp.bfloat16), w2_ref, Cout, g2, b2)
    out_ref[...] = y2.reshape(N, H, W * Cout)


@jax.jit
def double_conv(x_nchw, w1, g1, b1, w2, g2, b2):
    """x_nchw: (N, Cin, H, W). w1: (Cmid, Cin, 3, 3), w2: (Cout, Cmid, 3, 3)."""
    N, Cin, H, W = x_nchw.shape
    Cmid = w1.shape[0]
    Cout = w2.shape[0]
    f32 = jnp.float32
    bf16 = jnp.bfloat16

    # NCHW -> (N, H, W*Cin) packed layout (unavoidable with the NCHW module interface).
    # TODO(synk): accept/produce the packed (N, H, W*C) layout directly to drop these transposes.
    xk = jnp.transpose(x_nchw, (0, 2, 3, 1)).astype(f32).reshape(N, H, W * Cin)

    # Banded weights: S[kx, w', w] = 1 iff w' == w + kx - 1 (encodes kx taps + W zero pad).
    # The 3 ky taps are concatenated along the OUTPUT dimension -> one matmul per layer.
    S = jnp.stack([jnp.eye(W, k=1 - kx, dtype=f32) for kx in range(3)])  # (3, W, W)

    def banded_cat(w, ci, co):
        wt = jnp.transpose(w, (2, 3, 1, 0)).astype(f32)                  # (ky, kx, ci, co)
        wb = jnp.einsum('xuv,yxcm->yucvm', S, wt).reshape(3, W * ci, W * co)
        return jnp.moveaxis(wb, 0, 1).reshape(W * ci, 3 * W * co).astype(bf16)

    w1cat = banded_cat(w1, Cin, Cmid)     # (W*Cin,  3*W*Cmid) bf16
    w2cat = banded_cat(w2, Cmid, Cout)    # (W*Cmid, 3*W*Cout) bf16

    # One small packed table for all BN affine parameters (one DMA instead of four).
    Cmax = max(Cmid, Cout)
    padc = lambda v: jnp.pad(v.astype(f32), (0, Cmax - v.shape[0]))
    gb = jnp.stack([padc(g1), padc(b1), padc(g2), padc(b2)])             # (4, Cmax)

    vmem = pl.BlockSpec(memory_space=pltpu.MemorySpace.VMEM)
    kernel = functools.partial(_double_conv_kernel, N=N, H=H, W=W,
                               Cin=Cin, Cmid=Cmid, Cout=Cout)
    out = pl.pallas_call(
        kernel,
        out_shape=jax.ShapeDtypeStruct((N, H, W * Cout), f32),
        in_specs=[vmem, vmem, vmem, vmem],
        out_specs=vmem,
    )(xk, w1cat, w2cat, gb)

    # back to NCHW to match the PyTorch module's output layout
    return jnp.transpose(out.reshape(N, H, W, Cout), (0, 3, 1, 2))


def _reference(x, w1, g1, b1, w2, g2, b2):
    """Pure-JAX reference of the PyTorch module (training-mode BN)."""
    def conv(x, w):
        return jax.lax.conv_general_dilated(
            x, w, (1, 1), ((1, 1), (1, 1)),
            dimension_numbers=('NCHW', 'OIHW', 'NCHW'),
            precision=jax.lax.Precision.HIGHEST)

    def bn_relu(x, g, b):
        m = jnp.mean(x, axis=(0, 2, 3), keepdims=True)
        v = jnp.mean((x - m) ** 2, axis=(0, 2, 3), keepdims=True)
        y = (x - m) * jax.lax.rsqrt(v + EPS)
        y = y * g.reshape(1, -1, 1, 1) + b.reshape(1, -1, 1, 1)
        return jnp.maximum(y, 0.0)

    y = bn_relu(conv(x, w1), g1, b1)
    return bn_relu(conv(y, w2), g2, b2)


if __name__ == "__main__":
    key = jax.random.PRNGKey(0)
    N, Cin, H, W = 2, 4, 16, 16
    Cmid = Cout = 8  # mid_channels defaults to out_channels

    ks = jax.random.split(key, 7)
    x = jax.random.normal(ks[0], (N, Cin, H, W), dtype=jnp.float32)
    w1 = jax.random.normal(ks[1], (Cmid, Cin, 3, 3), dtype=jnp.float32) * 0.1
    w2 = jax.random.normal(ks[2], (Cout, Cmid, 3, 3), dtype=jnp.float32) * 0.1
    g1 = 1.0 + 0.1 * jax.random.normal(ks[3], (Cmid,), dtype=jnp.float32)
    b1 = 0.1 * jax.random.normal(ks[4], (Cmid,), dtype=jnp.float32)
    g2 = 1.0 + 0.1 * jax.random.normal(ks[5], (Cout,), dtype=jnp.float32)
    b2 = 0.1 * jax.random.normal(ks[6], (Cout,), dtype=jnp.float32)

    out = double_conv(x, w1, g1, b1, w2, g2, b2)
    jax.block_until_ready(out)
    assert out.shape == (N, Cout, H, W)

    expected = _reference(x, w1, g1, b1, w2, g2, b2)
    err = float(jnp.max(jnp.abs(out - expected)))
    # tolerance sized for bf16 MXU operands (f32 accumulation) vs. an f32 HIGHEST reference
    assert err < 7.5e-2, f"max abs error vs reference: {err}"
    print("KERNEL_OK")
</pallas_src>

<mosaic_0001>
module attributes {stable_mosaic.version = 11 : i64} {
  func.func @_double_conv_kernel(%arg0: memref<2x16x64xf32, #tpu.memory_space<vmem>>, %arg1: memref<64x384xbf16, #tpu.memory_space<vmem>>, %arg2: memref<128x384xbf16, #tpu.memory_space<vmem>>, %arg3: memref<4x8xf32, #tpu.memory_space<vmem>>, %arg4: memref<2x16x128xf32, #tpu.memory_space<vmem>>) attributes {dimension_semantics = [], scalar_prefetch = 0 : i64, scratch_operands = 0 : i64, tpu.core_type = #tpu.core_type<tc>} {
    %0 = tpu.iota {dimensions = array<i32: 0>} : vector<32x1xi32>
    %c16_i32 = arith.constant 16 : i32
    %c0_i32 = arith.constant 0 : i32
    %1 = arith.cmpi eq, %c16_i32, %c0_i32 : i32
    %c1_i32 = arith.constant 1 : i32
    %2 = arith.select %1, %c1_i32, %c16_i32 : i32
    %3 = vector.broadcast %2 : i32 to vector<32x1xi32>
    %4 = arith.remsi %0, %3 : vector<32x1xi32>
    %c0_i32_0 = arith.constant 0 : i32
    %5 = vector.broadcast %c0_i32_0 : i32 to vector<32x1xi32>
    %6 = arith.cmpi ne, %4, %5 : vector<32x1xi32>
    %c0_i32_1 = arith.constant 0 : i32
    %7 = vector.broadcast %c0_i32_1 : i32 to vector<32x1xi32>
    %8 = arith.cmpi slt, %4, %7 : vector<32x1xi32>
    %c0_i32_2 = arith.constant 0 : i32
    %9 = arith.cmpi slt, %2, %c0_i32_2 : i32
    %10 = vector.broadcast %9 : i1 to vector<32x1xi1>
    %11 = vector.broadcast %10 : vector<32x1xi1> to vector<32x1xi1>
    %12 = arith.xori %8, %11 : vector<32x1xi1>
    %13 = arith.andi %12, %6 : vector<32x1xi1>
    %14 = vector.broadcast %2 : i32 to vector<32x1xi32>
    %15 = arith.addi %4, %14 : vector<32x1xi32>
    %16 = arith.select %13, %15, %4 : vector<32x1xi1>, vector<32x1xi32>
    %c0_i32_3 = arith.constant 0 : i32
    %17 = vector.broadcast %c0_i32_3 : i32 to vector<32x1xi32>
    %18 = arith.cmpi eq, %16, %17 : vector<32x1xi32>
    %c15_i32 = arith.constant 15 : i32
    %19 = vector.broadcast %c15_i32 : i32 to vector<32x1xi32>
    %20 = arith.cmpi eq, %16, %19 : vector<32x1xi32>
    %c0 = arith.constant 0 : index
    %c0_4 = arith.constant 0 : index
    %21 = vector.load %arg3[%c0, %c0_4] : memref<4x8xf32, #tpu.memory_space<vmem>>, vector<1x8xf32>
    %c1 = arith.constant 1 : index
    %c0_5 = arith.constant 0 : index
    %22 = vector.load %arg3[%c1, %c0_5] : memref<4x8xf32, #tpu.memory_space<vmem>>, vector<1x8xf32>
    %c2 = arith.constant 2 : index
    %c0_6 = arith.constant 0 : index
    %23 = vector.load %arg3[%c2, %c0_6] : memref<4x8xf32, #tpu.memory_space<vmem>>, vector<1x8xf32>
    %c3 = arith.constant 3 : index
    %c0_7 = arith.constant 0 : index
    %24 = vector.load %arg3[%c3, %c0_7] : memref<4x8xf32, #tpu.memory_space<vmem>>, vector<1x8xf32>
    %c0_8 = arith.constant 0 : index
    %c0_9 = arith.constant 0 : index
    %c0_10 = arith.constant 0 : index
    %25 = vector.load %arg0[%c0_8, %c0_9, %c0_10] : memref<2x16x64xf32, #tpu.memory_space<vmem>>, vector<2x16x64xf32>
    %26 = vector.shape_cast %25 : vector<2x16x64xf32> to vector<32x64xf32>
    %27 = arith.truncf %26 : vector<32x64xf32> to vector<32x64xbf16>
    %c0_11 = arith.constant 0 : index
    %c0_12 = arith.constant 0 : index
    %28 = vector.load %arg1[%c0_11, %c0_12] : memref<64x384xbf16, #tpu.memory_space<vmem>>, vector<64x384xbf16>
    %cst = arith.constant dense<0.000000e+00> : vector<32x384xf32>
    %29 = tpu.matmul %27, %28, %cst {dimension_numbers = #tpu.dot_dimension_numbers<[1], [0], [0], [1], [0, 0, 1, 1], [], []>} : vector<32x64xbf16>, vector<64x384xbf16>, vector<32x384xf32> -> vector<32x384xf32>
    %30 = vector.extract_strided_slice %29 {offsets = [0, 0], sizes = [32, 128], strides = [1, 1]} : vector<32x384xf32> to vector<32x128xf32>
    %31 = vector.extract_strided_slice %29 {offsets = [0, 128], sizes = [32, 128], strides = [1, 1]} : vector<32x384xf32> to vector<32x128xf32>
    %32 = vector.extract_strided_slice %29 {offsets = [0, 256], sizes = [32, 128], strides = [1, 1]} : vector<32x384xf32> to vector<32x128xf32>
    %cst_13 = arith.constant 0.000000e+00 : f32
    %33 = vector.broadcast %cst_13 : f32 to vector<1x128xf32>
    %34 = vector.extract_strided_slice %30 {offsets = [0, 0], sizes = [31, 128], strides = [1, 1]} : vector<32x128xf32> to vector<31x128xf32>
    %35 = tpu.concatenate %33, %34 in 0 : vector<1x128xf32>, vector<31x128xf32> -> vector<32x128xf32>
    %36 = vector.extract_strided_slice %32 {offsets = [1, 0], sizes = [31, 128], strides = [1, 1]} : vector<32x128xf32> to vector<31x128xf32>
    %37 = tpu.concatenate %36, %33 in 0 : vector<31x128xf32>, vector<1x128xf32> -> vector<32x128xf32>
    %cst_14 = arith.constant 0.000000e+00 : f32
    %38 = vector.shape_cast %18 : vector<32x1xi1> to vector<32x1xi1>
    %39 = vector.broadcast %38 : vector<32x1xi1> to vector<32x128xi1>
    %40 = vector.broadcast %cst_14 : f32 to vector<32x128xf32>
    %41 = arith.select %39, %40, %35 : vector<32x128xi1>, vector<32x128xf32>
    %42 = arith.addf %31, %41 : vector<32x128xf32>
    %cst_15 = arith.constant 0.000000e+00 : f32
    %43 = vector.shape_cast %20 : vector<32x1xi1> to vector<32x1xi1>
    %44 = vector.broadcast %43 : vector<32x1xi1> to vector<32x128xi1>
    %45 = vector.broadcast %cst_15 : f32 to vector<32x128xf32>
    %46 = arith.select %44, %45, %37 : vector<32x128xi1>, vector<32x128xf32>
    %47 = arith.addf %42, %46 : vector<32x128xf32>
    %cst_16 = arith.constant dense<0.000000e+00> : vector<128xf32>
    %48 = vector.multi_reduction <add>, %47, %cst_16 [0] : vector<32x128xf32> to vector<128xf32>
    %49 = vector.shape_cast %48 : vector<128xf32> to vector<1x128xf32>
    %50 = arith.mulf %47, %47 : vector<32x128xf32>
    %cst_17 = arith.constant dense<0.000000e+00> : vector<128xf32>
    %51 = vector.multi_reduction <add>, %50, %cst_17 [0] : vector<32x128xf32> to vector<128xf32>
    %52 = vector.shape_cast %51 : vector<128xf32> to vector<1x128xf32>
    %53 = tpu.concatenate %49, %52 in 0 : vector<1x128xf32>, vector<1x128xf32> -> vector<2x128xf32>
    %54 = tpu.iota {dimensions = array<i32: 0>} : vector<128x8xi32>
    %55 = tpu.iota {dimensions = array<i32: 1>} : vector<128x8xi32>
    %c8_i32 = arith.constant 8 : i32
    %c0_i32_18 = arith.constant 0 : i32
    %56 = arith.cmpi eq, %c8_i32, %c0_i32_18 : i32
    %c1_i32_19 = arith.constant 1 : i32
    %57 = arith.select %56, %c1_i32_19, %c8_i32 : i32
    %58 = vector.broadcast %57 : i32 to vector<128x8xi32>
    %59 = arith.remsi %54, %58 : vector<128x8xi32>
    %c0_i32_20 = arith.constant 0 : i32
    %60 = vector.broadcast %c0_i32_20 : i32 to vector<128x8xi32>
    %61 = arith.cmpi ne, %59, %60 : vector<128x8xi32>
    %c0_i32_21 = arith.constant 0 : i32
    %62 = vector.broadcast %c0_i32_21 : i32 to vector<128x8xi32>
    %63 = arith.cmpi slt, %59, %62 : vector<128x8xi32>
    %c0_i32_22 = arith.constant 0 : i32
    %64 = arith.cmpi slt, %57, %c0_i32_22 : i32
    %65 = vector.broadcast %64 : i1 to vector<128x8xi1>
    %66 = vector.broadcast %65 : vector<128x8xi1> to vector<128x8xi1>
    %67 = arith.xori %63, %66 : vector<128x8xi1>
    %68 = arith.andi %67, %61 : vector<128x8xi1>
    %69 = vector.broadcast %57 : i32 to vector<128x8xi32>
    %70 = arith.addi %59, %69 : vector<128x8xi32>
    %71 = arith.select %68, %70, %59 : vector<128x8xi1>, vector<128x8xi32>
    %72 = arith.cmpi eq, %71, %55 : vector<128x8xi32>
    %73 = arith.extui %72 : vector<128x8xi1> to vector<128x8xi32>
    %74 = arith.sitofp %73 : vector<128x8xi32> to vector<128x8xf32>
    %cst_23 = arith.constant dense<0.000000e+00> : vector<2x8xf32>
    %75 = tpu.matmul %53, %74, %cst_23 {dimension_numbers = #tpu.dot_dimension_numbers<[1], [0], [0], [1], [0, 0, 1, 1], [], []>} : vector<2x128xf32>, vector<128x8xf32>, vector<2x8xf32> -> vector<2x8xf32>
    %76 = vector.extract_strided_slice %75 {offsets = [0, 0], sizes = [1, 8], strides = [1, 1]} : vector<2x8xf32> to vector<1x8xf32>
    %cst_24 = arith.constant 0.001953125 : f32
    %77 = vector.broadcast %cst_24 : f32 to vector<1x8xf32>
    %78 = arith.mulf %76, %77 : vector<1x8xf32>
    %79 = vector.extract_strided_slice %75 {offsets = [1, 0], sizes = [1, 8], strides = [1, 1]} : vector<2x8xf32> to vector<1x8xf32>
    %cst_25 = arith.constant 0.001953125 : f32
    %80 = vector.broadcast %cst_25 : f32 to vector<1x8xf32>
    %81 = arith.mulf %79, %80 : vector<1x8xf32>
    %82 = arith.mulf %78, %78 : vector<1x8xf32>
    %83 = arith.subf %81, %82 : vector<1x8xf32>
    %cst_26 = arith.constant 0.000000e+00 : f32
    %84 = vector.broadcast %cst_26 : f32 to vector<1x8xf32>
    %85 = arith.maximumf %83, %84 : vector<1x8xf32>
    %cst_27 = arith.constant 9.99999974E-6 : f32
    %86 = vector.broadcast %cst_27 : f32 to vector<1x8xf32>
    %87 = arith.addf %85, %86 : vector<1x8xf32>
    %88 = math.rsqrt %87 : vector<1x8xf32>
    %89 = arith.mulf %21, %88 : vector<1x8xf32>
    %90 = arith.mulf %78, %89 : vector<1x8xf32>
    %91 = arith.subf %22, %90 : vector<1x8xf32>
    %92 = tpu.iota {dimensions = array<i32: 0>} : vector<8x128xi32>
    %93 = tpu.iota {dimensions = array<i32: 1>} : vector<8x128xi32>
    %c8_i32_28 = arith.constant 8 : i32
    %c0_i32_29 = arith.constant 0 : i32
    %94 = arith.cmpi eq, %c8_i32_28, %c0_i32_29 : i32
    %c1_i32_30 = arith.constant 1 : i32
    %95 = arith.select %94, %c1_i32_30, %c8_i32_28 : i32
    %96 = vector.broadcast %95 : i32 to vector<8x128xi32>
    %97 = arith.remsi %93, %96 : vector<8x128xi32>
    %c0_i32_31 = arith.constant 0 : i32
    %98 = vector.broadcast %c0_i32_31 : i32 to vector<8x128xi32>
    %99 = arith.cmpi ne, %97, %98 : vector<8x128xi32>
    %c0_i32_32 = arith.constant 0 : i32
    %100 = vector.broadcast %c0_i32_32 : i32 to vector<8x128xi32>
    %101 = arith.cmpi slt, %97, %100 : vector<8x128xi32>
    %c0_i32_33 = arith.constant 0 : i32
    %102 = arith.cmpi slt, %95, %c0_i32_33 : i32
    %103 = vector.broadcast %102 : i1 to vector<8x128xi1>
    %104 = vector.broadcast %103 : vector<8x128xi1> to vector<8x128xi1>
    %105 = arith.xori %101, %104 : vector<8x128xi1>
    %106 = arith.andi %105, %99 : vector<8x128xi1>
    %107 = vector.broadcast %95 : i32 to vector<8x128xi32>
    %108 = arith.addi %97, %107 : vector<8x128xi32>
    %109 = arith.select %106, %108, %97 : vector<8x128xi1>, vector<8x128xi32>
    %110 = arith.cmpi eq, %109, %92 : vector<8x128xi32>
    %111 = arith.extui %110 : vector<8x128xi1> to vector<8x128xi32>
    %112 = arith.sitofp %111 : vector<8x128xi32> to vector<8x128xf32>
    %113 = tpu.concatenate %89, %91 in 0 : vector<1x8xf32>, vector<1x8xf32> -> vector<2x8xf32>
    %cst_34 = arith.constant dense<0.000000e+00> : vector<2x128xf32>
    %114 = tpu.matmul %113, %112, %cst_34 {dimension_numbers = #tpu.dot_dimension_numbers<[1], [0], [0], [1], [0, 0, 1, 1], [], []>} : vector<2x8xf32>, vector<8x128xf32>, vector<2x128xf32> -> vector<2x128xf32>
    %115 = vector.extract_strided_slice %114 {offsets = [0, 0], sizes = [1, 128], strides = [1, 1]} : vector<2x128xf32> to vector<1x128xf32>
    %116 = vector.broadcast %115 : vector<1x128xf32> to vector<32x128xf32>
    %117 = arith.mulf %47, %116 : vector<32x128xf32>
    %118 = vector.extract_strided_slice %114 {offsets = [1, 0], sizes = [1, 128], strides = [1, 1]} : vector<2x128xf32> to vector<1x128xf32>
    %119 = vector.broadcast %118 : vector<1x128xf32> to vector<32x128xf32>
    %120 = arith.addf %117, %119 : vector<32x128xf32>
    %cst_35 = arith.constant 0.000000e+00 : f32
    %121 = vector.broadcast %cst_35 : f32 to vector<32x128xf32>
    %122 = arith.maximumf %120, %121 : vector<32x128xf32>
    %123 = arith.truncf %122 : vector<32x128xf32> to vector<32x128xbf16>
    %c0_36 = arith.constant 0 : index
    %c0_37 = arith.constant 0 : index
    %124 = vector.load %arg2[%c0_36, %c0_37] : memref<128x384xbf16, #tpu.memory_space<vmem>>, vector<128x384xbf16>
    %cst_38 = arith.constant dense<0.000000e+00> : vector<32x384xf32>
    %125 = tpu.matmul %123, %124, %cst_38 {dimension_numbers = #tpu.dot_dimension_numbers<[1], [0], [0], [1], [0, 0, 1, 1], [], []>} : vector<32x128xbf16>, vector<128x384xbf16>, vector<32x384xf32> -> vector<32x384xf32>
    %126 = vector.extract_strided_slice %125 {offsets = [0, 0], sizes = [32, 128], strides = [1, 1]} : vector<32x384xf32> to vector<32x128xf32>
    %127 = vector.extract_strided_slice %125 {offsets = [0, 128], sizes = [32, 128], strides = [1, 1]} : vector<32x384xf32> to vector<32x128xf32>
    %128 = vector.extract_strided_slice %125 {offsets = [0, 256], sizes = [32, 128], strides = [1, 1]} : vector<32x384xf32> to vector<32x128xf32>
    %cst_39 = arith.constant 0.000000e+00 : f32
    %129 = vector.broadcast %cst_39 : f32 to vector<1x128xf32>
    %130 = vector.extract_strided_slice %126 {offsets = [0, 0], sizes = [31, 128], strides = [1, 1]} : vector<32x128xf32> to vector<31x128xf32>
    %131 = tpu.concatenate %129, %130 in 0 : vector<1x128xf32>, vector<31x128xf32> -> vector<32x128xf32>
    %132 = vector.extract_strided_slice %128 {offsets = [1, 0], sizes = [31, 128], strides = [1, 1]} : vector<32x128xf32> to vector<31x128xf32>
    %133 = tpu.concatenate %132, %129 in 0 : vector<31x128xf32>, vector<1x128xf32> -> vector<32x128xf32>
    %cst_40 = arith.constant 0.000000e+00 : f32
    %134 = vector.shape_cast %18 : vector<32x1xi1> to vector<32x1xi1>
    %135 = vector.broadcast %134 : vector<32x1xi1> to vector<32x128xi1>
    %136 = vector.broadcast %cst_40 : f32 to vector<32x128xf32>
    %137 = arith.select %135, %136, %131 : vector<32x128xi1>, vector<32x128xf32>
    %138 = arith.addf %127, %137 : vector<32x128xf32>
    %cst_41 = arith.constant 0.000000e+00 : f32
    %139 = vector.shape_cast %20 : vector<32x1xi1> to vector<32x1xi1>
    %140 = vector.broadcast %139 : vector<32x1xi1> to vector<32x128xi1>
    %141 = vector.broadcast %cst_41 : f32 to vector<32x128xf32>
    %142 = arith.select %140, %141, %133 : vector<32x128xi1>, vector<32x128xf32>
    %143 = arith.addf %138, %142 : vector<32x128xf32>
    %cst_42 = arith.constant dense<0.000000e+00> : vector<128xf32>
    %144 = vector.multi_reduction <add>, %143, %cst_42 [0] : vector<32x128xf32> to vector<128xf32>
    %145 = vector.shape_cast %144 : vector<128xf32> to vector<1x128xf32>
    %146 = arith.mulf %143, %143 : vector<32x128xf32>
    %cst_43 = arith.constant dense<0.000000e+00> : vector<128xf32>
    %147 = vector.multi_reduction <add>, %146, %cst_43 [0] : vector<32x128xf32> to vector<128xf32>
    %148 = vector.shape_cast %147 : vector<128xf32> to vector<1x128xf32>
    %149 = tpu.concatenate %145, %148 in 0 : vector<1x128xf32>, vector<1x128xf32> -> vector<2x128xf32>
    %150 = tpu.iota {dimensions = array<i32: 0>} : vector<128x8xi32>
    %151 = tpu.iota {dimensions = array<i32: 1>} : vector<128x8xi32>
    %c8_i32_44 = arith.constant 8 : i32
    %c0_i32_45 = arith.constant 0 : i32
    %152 = arith.cmpi eq, %c8_i32_44, %c0_i32_45 : i32
    %c1_i32_46 = arith.constant 1 : i32
    %153 = arith.select %152, %c1_i32_46, %c8_i32_44 : i32
    %154 = vector.broadcast %153 : i32 to vector<128x8xi32>
    %155 = arith.remsi %150, %154 : vector<128x8xi32>
    %c0_i32_47 = arith.constant 0 : i32
    %156 = vector.broadcast %c0_i32_47 : i32 to vector<128x8xi32>
    %157 = arith.cmpi ne, %155, %156 : vector<128x8xi32>
    %c0_i32_48 = arith.constant 0 : i32
    %158 = vector.broadcast %c0_i32_48 : i32 to vector<128x8xi32>
    %159 = arith.cmpi slt, %155, %158 : vector<128x8xi32>
    %c0_i32_49 = arith.constant 0 : i32
    %160 = arith.cmpi slt, %153, %c0_i32_49 : i32
    %161 = vector.broadcast %160 : i1 to vector<128x8xi1>
    %162 = vector.broadcast %161 : vector<128x8xi1> to vector<128x8xi1>
    %163 = arith.xori %159, %162 : vector<128x8xi1>
    %164 = arith.andi %163, %157 : vector<128x8xi1>
    %165 = vector.broadcast %153 : i32 to vector<128x8xi32>
    %166 = arith.addi %155, %165 : vector<128x8xi32>
    %167 = arith.select %164, %166, %155 : vector<128x8xi1>, vector<128x8xi32>
    %168 = arith.cmpi eq, %167, %151 : vector<128x8xi32>
    %169 = arith.extui %168 : vector<128x8xi1> to vector<128x8xi32>
    %170 = arith.sitofp %169 : vector<128x8xi32> to vector<128x8xf32>
    %cst_50 = arith.constant dense<0.000000e+00> : vector<2x8xf32>
    %171 = tpu.matmul %149, %170, %cst_50 {dimension_numbers = #tpu.dot_dimension_numbers<[1], [0], [0], [1], [0, 0, 1, 1], [], []>} : vector<2x128xf32>, vector<128x8xf32>, vector<2x8xf32> -> vector<2x8xf32>
    %172 = vector.extract_strided_slice %171 {offsets = [0, 0], sizes = [1, 8], strides = [1, 1]} : vector<2x8xf32> to vector<1x8xf32>
    %cst_51 = arith.constant 0.001953125 : f32
    %173 = vector.broadcast %cst_51 : f32 to vector<1x8xf32>
    %174 = arith.mulf %172, %173 : vector<1x8xf32>
    %175 = vector.extract_strided_slice %171 {offsets = [1, 0], sizes = [1, 8], strides = [1, 1]} : vector<2x8xf32> to vector<1x8xf32>
    %cst_52 = arith.constant 0.001953125 : f32
    %176 = vector.broadcast %cst_52 : f32 to vector<1x8xf32>
    %177 = arith.mulf %175, %176 : vector<1x8xf32>
    %178 = arith.mulf %174, %174 : vector<1x8xf32>
    %179 = arith.subf %177, %178 : vector<1x8xf32>
    %cst_53 = arith.constant 0.000000e+00 : f32
    %180 = vector.broadcast %cst_53 : f32 to vector<1x8xf32>
    %181 = arith.maximumf %179, %180 : vector<1x8xf32>
    %cst_54 = arith.constant 9.99999974E-6 : f32
    %182 = vector.broadcast %cst_54 : f32 to vector<1x8xf32>
    %183 = arith.addf %181, %182 : vector<1x8xf32>
    %184 = math.rsqrt %183 : vector<1x8xf32>
    %185 = arith.mulf %23, %184 : vector<1x8xf32>
    %186 = arith.mulf %174, %185 : vector<1x8xf32>
    %187 = arith.subf %24, %186 : vector<1x8xf32>
    %188 = tpu.iota {dimensions = array<i32: 0>} : vector<8x128xi32>
    %189 = tpu.iota {dimensions = array<i32: 1>} : vector<8x128xi32>
    %c8_i32_55 = arith.constant 8 : i32
    %c0_i32_56 = arith.constant 0 : i32
    %190 = arith.cmpi eq, %c8_i32_55, %c0_i32_56 : i32
    %c1_i32_57 = arith.constant 1 : i32
    %191 = arith.select %190, %c1_i32_57, %c8_i32_55 : i32
    %192 = vector.broadcast %191 : i32 to vector<8x128xi32>
    %193 = arith.remsi %189, %192 : vector<8x128xi32>
    %c0_i32_58 = arith.constant 0 : i32
    %194 = vector.broadcast %c0_i32_58 : i32 to vector<8x128xi32>
    %195 = arith.cmpi ne, %193, %194 : vector<8x128xi32>
    %c0_i32_59 = arith.constant 0 : i32
    %196 = vector.broadcast %c0_i32_59 : i32 to vector<8x128xi32>
    %197 = arith.cmpi slt, %193, %196 : vector<8x128xi32>
    %c0_i32_60 = arith.constant 0 : i32
    %198 = arith.cmpi slt, %191, %c0_i32_60 : i32
    %199 = vector.broadcast %198 : i1 to vector<8x128xi1>
    %200 = vector.broadcast %199 : vector<8x128xi1> to vector<8x128xi1>
    %201 = arith.xori %197, %200 : vector<8x128xi1>
    %202 = arith.andi %201, %195 : vector<8x128xi1>
    %203 = vector.broadcast %191 : i32 to vector<8x128xi32>
    %204 = arith.addi %193, %203 : vector<8x128xi32>
    %205 = arith.select %202, %204, %193 : vector<8x128xi1>, vector<8x128xi32>
    %206 = arith.cmpi eq, %205, %188 : vector<8x128xi32>
    %207 = arith.extui %206 : vector<8x128xi1> to vector<8x128xi32>
    %208 = arith.sitofp %207 : vector<8x128xi32> to vector<8x128xf32>
    %209 = tpu.concatenate %185, %187 in 0 : vector<1x8xf32>, vector<1x8xf32> -> vector<2x8xf32>
    %cst_61 = arith.constant dense<0.000000e+00> : vector<2x128xf32>
    %210 = tpu.matmul %209, %208, %cst_61 {dimension_numbers = #tpu.dot_dimension_numbers<[1], [0], [0], [1], [0, 0, 1, 1], [], []>} : vector<2x8xf32>, vector<8x128xf32>, vector<2x128xf32> -> vector<2x128xf32>
    %211 = vector.extract_strided_slice %210 {offsets = [0, 0], sizes = [1, 128], strides = [1, 1]} : vector<2x128xf32> to vector<1x128xf32>
    %212 = vector.broadcast %211 : vector<1x128xf32> to vector<32x128xf32>
    %213 = arith.mulf %143, %212 : vector<32x128xf32>
    %214 = vector.extract_strided_slice %210 {offsets = [1, 0], sizes = [1, 128], strides = [1, 1]} : vector<2x128xf32> to vector<1x128xf32>
    %215 = vector.broadcast %214 : vector<1x128xf32> to vector<32x128xf32>
    %216 = arith.addf %213, %215 : vector<32x128xf32>
    %cst_62 = arith.constant 0.000000e+00 : f32
    %217 = vector.broadcast %cst_62 : f32 to vector<32x128xf32>
    %218 = arith.maximumf %216, %217 : vector<32x128xf32>
    %219 = vector.shape_cast %218 : vector<32x128xf32> to vector<2x16x128xf32>
    %c0_63 = arith.constant 0 : index
    %c0_64 = arith.constant 0 : index
    %c0_65 = arith.constant 0 : index
    %220 = vector.load %arg4[%c0_63, %c0_64, %c0_65] : memref<2x16x128xf32, #tpu.memory_space<vmem>>, vector<2x16x128xf32>
    tpu.vector_store %arg4[%c0_63, %c0_64, %c0_65], %219 {strides = array<i32>} : memref<2x16x128xf32, #tpu.memory_space<vmem>>, vector<2x16x128xf32>,
    return
  }
}

</mosaic_0001>

<llo_original>
// kernel: double_conv.1
$region0: #{double_conv.1}
  #allocation0 [shape = 'u32[]', space=smem, size = 0x4, offset = 0x4, fixed_abs, tag = 'smem constant byte address 0x4 - core index']
  #allocation1 [shape = 'u32[144,128]{1,0:T(1,128)}', space=vmem, size = 0x12000, scoped, tag = 'internal scratch']
  %s0 = inlined_call_operand.vmem [shape: f32[2,16,64], index: 0, kind: input, shape index: {}]
  %s1 = inlined_call_operand.vmem [shape: bf16[64,384], index: 1, kind: input, shape index: {}]
  %s2 = inlined_call_operand.vmem [shape: bf16[128,384], index: 2, kind: input, shape index: {}]
  %s3 = inlined_call_operand.vmem [shape: f32[4,8], index: 3, kind: input, shape index: {}]
  %s4 = inlined_call_operand.vmem [shape: f32[2,16,128], index: 4, kind: output, shape index: {}]
  %s5 = sld [smem:[#allocation0]]
  $region26: #{double_conv.1} parent=0
    _
  %s7 = ssub.s32 1, %s5
  %s8 = scalar_select 0, %s7, %s5
  // Predicated region
  $region2: #{double_conv.1} parent=0 // pred_check
    _
  $region3: #{double_conv.1} parent=0 // pred_check_branch
    %10 = sbr.rel (0) target = $region5
  $region4: #{double_conv.1} parent=0 // pred_region
    _
  $region5: #{double_conv.1} parent=0 // pred_fallthru
    _
  // Predicated region
  $region6: #{double_conv.1} parent=0 // pred_check
    _
  $region7: #{double_conv.1} parent=0 // pred_check_branch
    %12 = sbr.rel (0) target = $region9
  $region8: #{double_conv.1} parent=0 // pred_region
    _
  $region9: #{double_conv.1} parent=0 // pred_fallthru
    _
  // Predicated region
  $region10: #{double_conv.1} parent=0 // pred_check
    _
  $region11: #{double_conv.1} parent=0 // pred_check_branch
    %14 = sbr.rel (0) target = $region13
  $region12: #{double_conv.1} parent=0 // pred_region
    _
  $region13: #{double_conv.1} parent=0 // pred_fallthru
    _
  // Predicated region
  $region14: #{double_conv.1} parent=0 // pred_check
    _
  $region15: #{double_conv.1} parent=0 // pred_check_branch
    %16 = sbr.rel (0) target = $region17
  $region16: #{double_conv.1} parent=0 // pred_region
    _
  $region17: #{double_conv.1} parent=0 // pred_fallthru
    _
  %v18 = vlaneseq
  %v19 = vshrl.u32 %v18, 7
  %v20 = vadd.s32 %v19, 8
  %v21 = vadd.s32 %v19, 16
  %v22 = vadd.s32 %v19, 24
  %vm23 = vcmp.lt.s32.totalorder %v19, 0
  %v24 = vsub.s32 0, %v19
  %v25 = vsel %vm23, %v24, %v19
  %v26 = vshrl.u32 %v25, 4
  %v27 = vand.u32 %v25, 15
  %v28 = vsub.s32 0, %v27
  %v29 = vsel %vm23, %v28, %v27
  %vm30 = vcmp.lt.s32.totalorder %v20, 0
  %v31 = vsub.s32 0, %v20
  %v32 = vsel %vm30, %v31, %v20
  %v33 = vshrl.u32 %v32, 4
  %v34 = vand.u32 %v32, 15
  %v35 = vsub.s32 0, %v34
  %v36 = vsel %vm30, %v35, %v34
  %vm37 = vcmp.lt.s32.totalorder %v21, 0
  %v38 = vsub.s32 0, %v21
  %v39 = vsel %vm37, %v38, %v21
  %v40 = vshrl.u32 %v39, 4
  %v41 = vand.u32 %v39, 15
  %v42 = vsub.s32 0, %v41
  %v43 = vsel %vm37, %v42, %v41
  %vm44 = vcmp.lt.s32.totalorder %v22, 0
  %v45 = vsub.s32 0, %v22
  %v46 = vsel %vm44, %v45, %v22
  %v47 = vshrl.u32 %v46, 4
  %v48 = vand.u32 %v46, 15
  %v49 = vsub.s32 0, %v48
  %v50 = vsel %vm44, %v49, %v48
  %vm51 = vcmp.ne.s32.totalorder %v29, 0
  %vm52 = vcmp.ne.s32.totalorder %v36, 0
  %vm53 = vcmp.ne.s32.totalorder %v43, 0
  %vm54 = vcmp.ne.s32.totalorder %v50, 0
  %vm55 = vcmp.lt.s32.totalorder %v29, 0
  %vm56 = vcmp.lt.s32.totalorder %v36, 0
  %vm57 = vcmp.lt.s32.totalorder %v43, 0
  %vm58 = vcmp.lt.s32.totalorder %v50, 0
  %vm59 = vmand %vm55, %vm51
  %vm60 = vmand %vm56, %vm52
  %vm61 = vmand %vm57, %vm53
  %vm62 = vmand %vm58, %vm54
  %v63 = vadd.s32 %v29, 16
  %v64 = vadd.s32 %v36, 16
  %v65 = vadd.s32 %v43, 16
  %v66 = vadd.s32 %v50, 16
  %v67 = vsel %vm59, %v63, %v29
  %v68 = vsel %vm60, %v64, %v36
  %v69 = vsel %vm61, %v65, %v43
  %v70 = vsel %vm62, %v66, %v50
  %vm71 = vcmp.eq.s32.totalorder %v67, 0
  %vm72 = vcmp.eq.s32.totalorder %v68, 0
  %vm73 = vcmp.eq.s32.totalorder %v69, 0
  %vm74 = vcmp.eq.s32.totalorder %v70, 0
  %vm75 = vcmp.eq.s32.totalorder %v67, 15
  %vm76 = vcmp.eq.s32.totalorder %v68, 15
  %vm77 = vcmp.eq.s32.totalorder %v69, 15
  %vm78 = vcmp.eq.s32.totalorder %v70, 15
  %v79 = vld [vmem:[%s3] sm:$0x1]
  %v80 = vld [vmem:[%s3 + $0x1] sm:$0x1]
  %v81 = vld [vmem:[%s3 + $0x2] sm:$0x1]
  %v82 = vld [vmem:[%s3 + $0x3] sm:$0x1]
  %v83 = vld [vmem:[%s0] sm:$0xff]
  %v84 = vld [vmem:[%s0 + $0x8] sm:$0xff]
  %v85 = vld [vmem:[%s0 + $0x10] sm:$0xff]
  %v86 = vld [vmem:[%s0 + $0x18] sm:$0xff]
  %v87 = vpack.c.bf16 %v84, %v83
  %v88 = vpack.c.bf16 %v86, %v85
  %v89 = vld [vmem:[%s1] sm:$0xff]
  %v90 = vld [vmem:[%s1 + $0x8] sm:$0xf]
  %v91 = vld [vmem:[%s1 + $0xc] sm:$0xff]
  %v92 = vld [vmem:[%s1 + $0x14] sm:$0xf]
  %v93 = vld [vmem:[%s1 + $0x18] sm:$0xff]
  %v94 = vld [vmem:[%s1 + $0x20] sm:$0xf]
  %v95 = vld [vmem:[%s1 + $0x24] sm:$0xff]
  %v96 = vld [vmem:[%s1 + $0x2c] sm:$0xf]
  %v97 = vld [vmem:[%s1 + $0x30] sm:$0xff]
  %v98 = vld [vmem:[%s1 + $0x38] sm:$0xf]
  %v99 = vld [vmem:[%s1 + $0x3c] sm:$0xff]
  %v100 = vld [vmem:[%s1 + $0x44] sm:$0xf]
  %v101 = vld [vmem:[%s1 + $0x48] sm:$0xff]
  %v102 = vld [vmem:[%s1 + $0x50] sm:$0xf]
  %v103 = vld [vmem:[%s1 + $0x54] sm:$0xff]
  %v104 = vld [vmem:[%s1 + $0x5c] sm:$0xf]
  %v121 = vunpack.c.l.b16 %v89
  %v122 = vunpack.c.h.b16 %v89
  %v123 = vunpack.c.l.b16 %v90
  %v124 = vunpack.c.l.b16 %v91
  %v125 = vunpack.c.h.b16 %v91
  %v126 = vunpack.c.l.b16 %v92
  %v127 = vunpack.c.l.b16 %v93
  %v128 = vunpack.c.h.b16 %v93
  %v129 = vunpack.c.l.b16 %v94
  %v130 = vunpack.c.l.b16 %v95
  %v131 = vunpack.c.h.b16 %v95
  %v132 = vunpack.c.l.b16 %v96
  %v133 = vunpack.c.l.b16 %v97
  %v134 = vunpack.c.h.b16 %v97
  %v135 = vunpack.c.l.b16 %v98
  %v136 = vunpack.c.l.b16 %v99
  %v137 = vunpack.c.h.b16 %v99
  %v138 = vunpack.c.l.b16 %v100
  %v139 = vunpack.c.l.b16 %v101
  %v140 = vunpack.c.h.b16 %v101
  %v141 = vunpack.c.l.b16 %v102
  %v142 = vunpack.c.l.b16 %v103
  %v143 = vunpack.c.h.b16 %v103
  %v144 = vunpack.c.l.b16 %v104
  %v145 = vpack.c.b16 %v124, %v121
  %v146 = vpack.c.b16 %v125, %v122
  %v147 = vpack.c.b16 %v126, %v123
  %v148 = vpack.c.b16 %v130, %v127
  %v149 = vpack.c.b16 %v131, %v128
  %v150 = vpack.c.b16 %v132, %v129
  %v151 = vpack.c.b16 %v136, %v133
  %v152 = vpack.c.b16 %v137, %v134
  %v153 = vpack.c.b16 %v138, %v135
  %v154 = vpack.c.b16 %v142, %v139
  %v155 = vpack.c.b16 %v143, %v140
  %v156 = vpack.c.b16 %v144, %v141
  %vm169 = vcmask 523264
  %v171 = vsel %vm169, %v87, 0
  %v174 = vsel %vm169, %v88, 0
  %176 = vmatprep.subr.bf16.mxu0 0
  %177 = vmatpush1.bf16.msra.mxu0 0
  %178 = vmatprep.subr.bf16.mxu0 0
  %179 = vmatpush1.bf16.msra.mxu0 0
  %180 = vmatprep.subr.bf16.mxu0 0
  %181 = vmatpush1.bf16.msra.mxu0 0
  %182 = vmatprep.subr.bf16.mxu0 0
  %183 = vmatpush1.bf16.msra.mxu0 0
  %184 = vmatprep.subr.bf16.mxu0 %v155
  %185 = vmatpush1.bf16.msra.mxu0 %v154
  %186 = vmatprep.subr.bf16.mxu0 %v152
  %187 = vmatpush1.bf16.msra.mxu0 %v151
  %188 = vmatprep.subr.bf16.mxu0 %v149
  %189 = vmatpush1.bf16.msra.mxu0 %v148
  %190 = vmatprep.subr.bf16.mxu0 %v146
  %191 = vmatpush1.bf16.msra.mxu0 %v145
  %192 = vmatprep.subr.bf16.mxu0 0
  %193 = vmatpush2.bf16.msra.mxu0 0
  %194 = vmatprep.subr.bf16.mxu0 0
  %195 = vmatpush2.bf16.msra.mxu0 0
  %196 = vmatprep.subr.bf16.mxu0 0
  %197 = vmatpush2.bf16.msra.mxu0 0
  %198 = vmatprep.subr.bf16.mxu0 0
  %199 = vmatpush2.bf16.msra.mxu0 0
  %200 = vmatprep.subr.bf16.mxu0 0
  %201 = vmatpush2.bf16.msra.mxu0 0
  %202 = vmatprep.subr.bf16.mxu0 0
  %203 = vmatpush2.bf16.msra.mxu0 0
  %204 = vmatprep.subr.bf16.mxu0 0
  %205 = vmatpush2.bf16.msra.mxu0 0
  %206 = vmatprep.subr.bf16.mxu0 0
  %207 = vmatpush2.bf16.msra.mxu0 0
  %208 = vmatprep.mubr.bf16.mxu0 0
  %209 = vmatmul.mubr.bf16.gmra.mxu0 %v171
  %v210 = vpop.f32.mrf.mxu0
  %v211 = vadd.f32 0.0, %v210
  %v212 = vpop.f32.mrf.mxu0
  %v213 = vadd.f32 0.0, %v212
  %v214 = vpop.f32.mrf.mxu0
  %v215 = vadd.f32 0.0, %v214
  %v216 = vpop.f32.mrf.mxu0
  %v217 = vadd.f32 0.0, %v216
  %218 = vmatprep.mubr.bf16.mxu0 0
  %219 = vmatmul.mubr.bf16.gmra.mxu0 %v174
  %v220 = vpop.f32.mrf.mxu0
  %v221 = vadd.f32 0.0, %v220
  %v222 = vpop.f32.mrf.mxu0
  %v223 = vadd.f32 0.0, %v222
  %v224 = vpop.f32.mrf.mxu0
  %v225 = vadd.f32 0.0, %v224
  %v226 = vpop.f32.mrf.mxu0
  %v227 = vadd.f32 0.0, %v226
  %228 = vdwg.mxu0
  %229 = vmatprep.subr.bf16.mxu0 0
  %230 = vmatpush1.bf16.msra.mxu0 0
  %231 = vmatprep.subr.bf16.mxu0 0
  %232 = vmatpush1.bf16.msra.mxu0 0
  %233 = vmatprep.subr.bf16.mxu0 0
  %234 = vmatpush1.bf16.msra.mxu0 0
  %235 = vmatprep.subr.bf16.mxu0 0
  %236 = vmatpush1.bf16.msra.mxu0 0
  %237 = vmatprep.subr.bf16.mxu0 0
  %238 = vmatpush1.bf16.msra.mxu0 %v156
  %239 = vmatprep.subr.bf16.mxu0 0
  %240 = vmatpush1.bf16.msra.mxu0 %v153
  %241 = vmatprep.subr.bf16.mxu0 0
  %242 = vmatpush1.bf16.msra.mxu0 %v150
  %243 = vmatprep.subr.bf16.mxu0 0
  %244 = vmatpush1.bf16.msra.mxu0 %v147
  %245 = vmatprep.subr.bf16.mxu0 0
  %246 = vmatpush2.bf16.msra.mxu0 0
  %247 = vmatprep.subr.bf16.mxu0 0
  %248 = vmatpush2.bf16.msra.mxu0 0
  %249 = vmatprep.subr.bf16.mxu0 0
  %250 = vmatpush2.bf16.msra.mxu0 0
  %251 = vmatprep.subr.bf16.mxu0 0
  %252 = vmatpush2.bf16.msra.mxu0 0
  %253 = vmatprep.subr.bf16.mxu0 0
  %254 = vmatpush2.bf16.msra.mxu0 0
  %255 = vmatprep.subr.bf16.mxu0 0
  %256 = vmatpush2.bf16.msra.mxu0 0
  %257 = vmatprep.subr.bf16.mxu0 0
  %258 = vmatpush2.bf16.msra.mxu0 0
  %259 = vmatprep.subr.bf16.mxu0 0
  %260 = vmatpush2.bf16.msra.mxu0 0
  %261 = vmatprep.mubr.bf16.mxu0 0
  %262 = vmatmul.mubr.bf16.gmra.mxu0 %v171
  %v263 = vpop.f32.mrf.mxu0
  %v264 = vadd.f32 0.0, %v263
  %v265 = vpop.f32.mrf.mxu0
  %v266 = vpop.f32.mrf.mxu0
  %v267 = vadd.f32 0.0, %v266
  %v268 = vpop.f32.mrf.mxu0
  %269 = vmatprep.mubr.bf16.mxu0 0
  %270 = vmatmul.mubr.bf16.gmra.mxu0 %v174
  %v271 = vpop.f32.mrf.mxu0
  %v272 = vadd.f32 0.0, %v271
  %v273 = vpop.f32.mrf.mxu0
  %v274 = vpop.f32.mrf.mxu0
  %v275 = vadd.f32 0.0, %v274
  %v276 = vpop.f32.mrf.mxu0
  %277 = vdwg.mxu0
  %vm282 = vcmask 1040384
  %v283 = vrot.slane %v211, 7
  %v284 = vrot.slane %v215, 7
  %v285 = vsel %vm282, %v283, %v284
  %v286 = vrot.slane %v221, 7
  %v287 = vsel %vm282, %v284, %v286
  %v288 = vrot.slane %v225, 7
  %v289 = vsel %vm282, %v286, %v288
  %v294 = vsel %vm282, 0.0, %v283
  %vm299 = vcmask 1046528
  %v300 = vrot.slane %v264, 1
  %v301 = vrot.slane %v267, 1
  %v302 = vsel %vm299, %v300, %v301
  %v303 = vrot.slane %v272, 1
  %v304 = vsel %vm299, %v301, %v303
  %v305 = vrot.slane %v275, 1
  %v306 = vsel %vm299, %v303, %v305
  %v311 = vsel %vm299, %v305, 0.0
  %v312 = vsel %vm71, 1, 0
  %v313 = vsel %vm72, 1, 0
  %v314 = vsel %vm73, 1, 0
  %v315 = vsel %vm74, 1, 0
  %vm316 = vcmp.eq.s32.totalorder %v312, 1
  %vm317 = vcmp.eq.s32.totalorder %v313, 1
  %vm318 = vcmp.eq.s32.totalorder %v314, 1
  %vm319 = vcmp.eq.s32.totalorder %v315, 1
  %v320 = vsel %vm316, 0.0, %v294
  %v321 = vsel %vm317, 0.0, %v285
  %v322 = vsel %vm318, 0.0, %v287
  %v323 = vsel %vm319, 0.0, %v289
  %v324 = vadd.f32 %v213, %v320
  %v325 = vadd.f32 %v217, %v321
  %v326 = vadd.f32 %v223, %v322
  %v327 = vadd.f32 %v227, %v323
  %v328 = vsel %vm75, 1, 0
  %v329 = vsel %vm76, 1, 0
  %v330 = vsel %vm77, 1, 0
  %v331 = vsel %vm78, 1, 0
  %vm332 = vcmp.eq.s32.totalorder %v328, 1
  %vm333 = vcmp.eq.s32.totalorder %v329, 1
  %vm334 = vcmp.eq.s32.totalorder %v330, 1
  %vm335 = vcmp.eq.s32.totalorder %v331, 1
  %v336 = vsel %vm332, 0.0, %v302
  %v337 = vsel %vm333, 0.0, %v304
  %v338 = vsel %vm334, 0.0, %v306
  %v339 = vsel %vm335, 0.0, %v311
  %v340 = vadd.f32 %v324, %v336
  %v341 = vadd.f32 %v325, %v337
  %v342 = vadd.f32 %v326, %v338
  %v343 = vadd.f32 %v327, %v339
  %v344 = vadd.f32 %v340, %v341
  %v345 = vadd.f32 %v344, %v342
  %v346 = vadd.f32 %v345, %v343
  %v347 = vrot.slane %v346, 4
  %v348 = vadd.f32 %v346, %v347
  %v349 = vrot.slane %v348, 2
  %v350 = vadd.f32 %v348, %v349
  %v351 = vrot.slane %v350, 1
  %v352 = vadd.f32 %v350, %v351
  %v353 = vmul.f32 %v340, %v340
  %v354 = vmul.f32 %v341, %v341
  %v355 = vmul.f32 %v342, %v342
  %v356 = vmul.f32 %v343, %v343
  %v357 = vadd.f32 %v353, %v354
  %v358 = vadd.f32 %v357, %v355
  %v359 = vadd.f32 %v358, %v356
  %v360 = vrot.slane %v359, 4
  %v361 = vadd.f32 %v359, %v360
  %v362 = vrot.slane %v361, 2
  %v363 = vadd.f32 %v361, %v362
  %v364 = vrot.slane %v363, 1
  %v365 = vadd.f32 %v363, %v364
  %v366 = vsel %vm282, %v352, %v365
  %v367 = vadd.s32 %v19, 32
  %v368 = vadd.s32 %v19, 40
  %v369 = vadd.s32 %v19, 48
  %v370 = vadd.s32 %v19, 56
  %v371 = vadd.s32 %v19, 64
  %v372 = vadd.s32 %v19, 72
  %v373 = vadd.s32 %v19, 80
  %v374 = vadd.s32 %v19, 88
  %v375 = vadd.s32 %v19, 96
  %v376 = vadd.s32 %v19, 104
  %v377 = vadd.s32 %v19, 112
  %v378 = vadd.s32 %v19, 120
  %v379 = vlaneseq
  %v380 = vand.u32 %v379, 127
  %vm381 = vcmp.lt.s32.totalorder %v19, 0
  %v382 = vsub.s32 0, %v19
  %v383 = vsel %vm381, %v382, %v19
  %v384 = vshrl.u32 %v383, 3
  %v385 = vand.u32 %v383, 7
  %v386 = vsub.s32 0, %v385
  %v387 = vsel %vm381, %v386, %v385
  %vm388 = vcmp.lt.s32.totalorder %v20, 0
  %v389 = vsub.s32 0, %v20
  %v390 = vsel %vm388, %v389, %v20
  %v391 = vshrl.u32 %v390, 3
  %v392 = vand.u32 %v390, 7
  %v393 = vsub.s32 0, %v392
  %v394 = vsel %vm388, %v393, %v392
  %vm395 = vcmp.lt.s32.totalorder %v21, 0
  %v396 = vsub.s32 0, %v21
  %v397 = vsel %vm395, %v396, %v21
  %v398 = vshrl.u32 %v397, 3
  %v399 = vand.u32 %v397, 7
  %v400 = vsub.s32 0, %v399
  %v401 = vsel %vm395, %v400, %v399
  %vm402 = vcmp.lt.s32.totalorder %v22, 0
  %v403 = vsub.s32 0, %v22
  %v404 = vsel %vm402, %v403, %v22
  %v405 = vshrl.u32 %v404, 3
  %v406 = vand.u32 %v404, 7
  %v407 = vsub.s32 0, %v406
  %v408 = vsel %vm402, %v407, %v406
  %vm409 = vcmp.lt.s32.totalorder %v367, 0
  %v410 = vsub.s32 0, %v367
  %v411 = vsel %vm409, %v410, %v367
  %v412 = vshrl.u32 %v411, 3
  %v413 = vand.u32 %v411, 7
  %v414 = vsub.s32 0, %v413
  %v415 = vsel %vm409, %v414, %v413
  %vm416 = vcmp.lt.s32.totalorder %v368, 0
  %v417 = vsub.s32 0, %v368
  %v418 = vsel %vm416, %v417, %v368
  %v419 = vshrl.u32 %v418, 3
  %v420 = vand.u32 %v418, 7
  %v421 = vsub.s32 0, %v420
  %v422 = vsel %vm416, %v421, %v420
  %vm423 = vcmp.lt.s32.totalorder %v369, 0
  %v424 = vsub.s32 0, %v369
  %v425 = vsel %vm423, %v424, %v369
  %v426 = vshrl.u32 %v425, 3
  %v427 = vand.u32 %v425, 7
  %v428 = vsub.s32 0, %v427
  %v429 = vsel %vm423, %v428, %v427
  %vm430 = vcmp.lt.s32.totalorder %v370, 0
  %v431 = vsub.s32 0, %v370
  %v432 = vsel %vm430, %v431, %v370
  %v433 = vshrl.u32 %v432, 3
  %v434 = vand.u32 %v432, 7
  %v435 = vsub.s32 0, %v434
  %v436 = vsel %vm430, %v435, %v434
  %vm437 = vcmp.lt.s32.totalorder %v371, 0
  %v438 = vsub.s32 0, %v371
  %v439 = vsel %vm437, %v438, %v371
  %v440 = vshrl.u32 %v439, 3
  %v441 = vand.u32 %v439, 7
  %v442 = vsub.s32 0, %v441
  %v443 = vsel %vm437, %v442, %v441
  %vm444 = vcmp.lt.s32.totalorder %v372, 0
  %v445 = vsub.s32 0, %v372
  %v446 = vsel %vm444, %v445, %v372
  %v447 = vshrl.u32 %v446, 3
  %v448 = vand.u32 %v446, 7
  %v449 = vsub.s32 0, %v448
  %v450 = vsel %vm444, %v449, %v448
  %vm451 = vcmp.lt.s32.totalorder %v373, 0
  %v452 = vsub.s32 0, %v373
  %v453 = vsel %vm451, %v452, %v373
  %v454 = vshrl.u32 %v453, 3
  %v455 = vand.u32 %v453, 7
  %v456 = vsub.s32 0, %v455
  %v457 = vsel %vm451, %v456, %v455
  %vm458 = vcmp.lt.s32.totalorder %v374, 0
  %v459 = vsub.s32 0, %v374
  %v460 = vsel %vm458, %v459, %v374
  %v461 = vshrl.u32 %v460, 3
  %v462 = vand.u32 %v460, 7
  %v463 = vsub.s32 0, %v462
  %v464 = vsel %vm458, %v463, %v462
  %vm465 = vcmp.lt.s32.totalorder %v375, 0
  %v466 = vsub.s32 0, %v375
  %v467 = vsel %vm465, %v466, %v375
  %v468 = vshrl.u32 %v467, 3
  %v469 = vand.u32 %v467, 7
  %v470 = vsub.s32 0, %v469
  %v471 = vsel %vm465, %v470, %v469
  %vm472 = vcmp.lt.s32.totalorder %v376, 0
  %v473 = vsub.s32 0, %v376
  %v474 = vsel %vm472, %v473, %v376
  %v475 = vshrl.u32 %v474, 3
  %v476 = vand.u32 %v474, 7
  %v477 = vsub.s32 0, %v476
  %v478 = vsel %vm472, %v477, %v476
  %vm479 = vcmp.lt.s32.totalorder %v377, 0
  %v480 = vsub.s32 0, %v377
  %v481 = vsel %vm479, %v480, %v377
  %v482 = vshrl.u32 %v481, 3
  %v483 = vand.u32 %v481, 7
  %v484 = vsub.s32 0, %v483
  %v485 = vsel %vm479, %v484, %v483
  %vm486 = vcmp.lt.s32.totalorder %v378, 0
  %v487 = vsub.s32 0, %v378
  %v488 = vsel %vm486, %v487, %v378
  %v489 = vshrl.u32 %v488, 3
  %v490 = vand.u32 %v488, 7
  %v491 = vsub.s32 0, %v490
  %v492 = vsel %vm486, %v491, %v490
  %vm493 = vcmp.ne.s32.totalorder %v387, 0
  %vm494 = vcmp.ne.s32.totalorder %v394, 0
  %vm495 = vcmp.ne.s32.totalorder %v401, 0
  %vm496 = vcmp.ne.s32.totalorder %v408, 0
  %vm497 = vcmp.ne.s32.totalorder %v415, 0
  %vm498 = vcmp.ne.s32.totalorder %v422, 0
  %vm499 = vcmp.ne.s32.totalorder %v429, 0
  %vm500 = vcmp.ne.s32.totalorder %v436, 0
  %vm501 = vcmp.ne.s32.totalorder %v443, 0
  %vm502 = vcmp.ne.s32.totalorder %v450, 0
  %vm503 = vcmp.ne.s32.totalorder %v457, 0
  %vm504 = vcmp.ne.s32.totalorder %v464, 0
  %vm505 = vcmp.ne.s32.totalorder %v471, 0
  %vm506 = vcmp.ne.s32.totalorder %v478, 0
  %vm507 = vcmp.ne.s32.totalorder %v485, 0
  %vm508 = vcmp.ne.s32.totalorder %v492, 0
  %vm509 = vcmp.lt.s32.totalorder %v387, 0
  %vm510 = vcmp.lt.s32.totalorder %v394, 0
  %vm511 = vcmp.lt.s32.totalorder %v401, 0
  %vm512 = vcmp.lt.s32.totalorder %v408, 0
  %vm513 = vcmp.lt.s32.totalorder %v415, 0
  %vm514 = vcmp.lt.s32.totalorder %v422, 0
  %vm515 = vcmp.lt.s32.totalorder %v429, 0
  %vm516 = vcmp.lt.s32.totalorder %v436, 0
  %vm517 = vcmp.lt.s32.totalorder %v443, 0
  %vm518 = vcmp.lt.s32.totalorder %v450, 0
  %vm519 = vcmp.lt.s32.totalorder %v457, 0
  %vm520 = vcmp.lt.s32.totalorder %v464, 0
  %vm521 = vcmp.lt.s32.totalorder %v471, 0
  %vm522 = vcmp.lt.s32.totalorder %v478, 0
  %vm523 = vcmp.lt.s32.totalorder %v485, 0
  %vm524 = vcmp.lt.s32.totalorder %v492, 0
  %vm525 = vmand %vm509, %vm493
  %vm526 = vmand %vm510, %vm494
  %vm527 = vmand %vm511, %vm495
  %vm528 = vmand %vm512, %vm496
  %vm529 = vmand %vm513, %vm497
  %vm530 = vmand %vm514, %vm498
  %vm531 = vmand %vm515, %vm499
  %vm532 = vmand %vm516, %vm500
  %vm533 = vmand %vm517, %vm501
  %vm534 = vmand %vm518, %vm502
  %vm535 = vmand %vm519, %vm503
  %vm536 = vmand %vm520, %vm504
  %vm537 = vmand %vm521, %vm505
  %vm538 = vmand %vm522, %vm506
  %vm539 = vmand %vm523, %vm507
  %vm540 = vmand %vm524, %vm508
  %v541 = vadd.s32 %v387, 8
  %v542 = vadd.s32 %v394, 8
  %v543 = vadd.s32 %v401, 8
  %v544 = vadd.s32 %v408, 8
  %v545 = vadd.s32 %v415, 8
  %v546 = vadd.s32 %v422, 8
  %v547 = vadd.s32 %v429, 8
  %v548 = vadd.s32 %v436, 8
  %v549 = vadd.s32 %v443, 8
  %v550 = vadd.s32 %v450, 8
  %v551 = vadd.s32 %v457, 8
  %v552 = vadd.s32 %v464, 8
  %v553 = vadd.s32 %v471, 8
  %v554 = vadd.s32 %v478, 8
  %v555 = vadd.s32 %v485, 8
  %v556 = vadd.s32 %v492, 8
  %v557 = vsel %vm525, %v541, %v387
  %v558 = vsel %vm526, %v542, %v394
  %v559 = vsel %vm527, %v543, %v401
  %v560 = vsel %vm528, %v544, %v408
  %v561 = vsel %vm529, %v545, %v415
  %v562 = vsel %vm530, %v546, %v422
  %v563 = vsel %vm531, %v547, %v429
  %v564 = vsel %vm532, %v548, %v436
  %v565 = vsel %vm533, %v549, %v443
  %v566 = vsel %vm534, %v550, %v450
  %v567 = vsel %vm535, %v551, %v457
  %v568 = vsel %vm536, %v552, %v464
  %v569 = vsel %vm537, %v553, %v471
  %v570 = vsel %vm538, %v554, %v478
  %v571 = vsel %vm539, %v555, %v485
  %v572 = vsel %vm540, %v556, %v492
  %vm573 = vcmp.eq.s32.totalorder %v557, %v380
  %vm574 = vcmp.eq.s32.totalorder %v558, %v380
  %vm575 = vcmp.eq.s32.totalorder %v559, %v380
  %vm576 = vcmp.eq.s32.totalorder %v560, %v380
  %vm577 = vcmp.eq.s32.totalorder %v561, %v380
  %vm578 = vcmp.eq.s32.totalorder %v562, %v380
  %vm579 = vcmp.eq.s32.totalorder %v563, %v380
  %vm580 = vcmp.eq.s32.totalorder %v564, %v380
  %vm581 = vcmp.eq.s32.totalorder %v565, %v380
  %vm582 = vcmp.eq.s32.totalorder %v566, %v380
  %vm583 = vcmp.eq.s32.totalorder %v567, %v380
  %vm584 = vcmp.eq.s32.totalorder %v568, %v380
  %vm585 = vcmp.eq.s32.totalorder %v569, %v380
  %vm586 = vcmp.eq.s32.totalorder %v570, %v380
  %vm587 = vcmp.eq.s32.totalorder %v571, %v380
  %vm588 = vcmp.eq.s32.totalorder %v572, %v380
  %v589 = vsel %vm573, 1, 0
  %v590 = vsel %vm574, 1, 0
  %v591 = vsel %vm575, 1, 0
  %v592 = vsel %vm576, 1, 0
  %v593 = vsel %vm577, 1, 0
  %v594 = vsel %vm578, 1, 0
  %v595 = vsel %vm579, 1, 0
  %v596 = vsel %vm580, 1, 0
  %v597 = vsel %vm581, 1, 0
  %v598 = vsel %vm582, 1, 0
  %v599 = vsel %vm583, 1, 0
  %v600 = vsel %vm584, 1, 0
  %v601 = vsel %vm585, 1, 0
  %v602 = vsel %vm586, 1, 0
  %v603 = vsel %vm587, 1, 0
  %v604 = vsel %vm588, 1, 0
  %v605 = vcvt.s32.f32 %v589
  %v606 = vcvt.s32.f32 %v590
  %v607 = vcvt.s32.f32 %v591
  %v608 = vcvt.s32.f32 %v592
  %v609 = vcvt.s32.f32 %v593
  %v610 = vcvt.s32.f32 %v594
  %v611 = vcvt.s32.f32 %v595
  %v612 = vcvt.s32.f32 %v596
  %v613 = vcvt.s32.f32 %v597
  %v614 = vcvt.s32.f32 %v598
  %v615 = vcvt.s32.f32 %v599
  %v616 = vcvt.s32.f32 %v600
  %v617 = vcvt.s32.f32 %v601
  %v618 = vcvt.s32.f32 %v602
  %v619 = vcvt.s32.f32 %v603
  %v620 = vcvt.s32.f32 %v604
  %621 = vmatprep.subr.mxu0 0.0
  %622 = vmatpush1.msra.mxu0 %v620
  %623 = vmatprep.subr.mxu0 0.0
  %624 = vmatpush1.msra.mxu0 %v619
  %625 = vmatprep.subr.mxu0 0.0
  %626 = vmatpush1.msra.mxu0 %v618
  %627 = vmatprep.subr.mxu0 0.0
  %628 = vmatpush1.msra.mxu0 %v617
  %629 = vmatprep.subr.mxu0 0.0
  %630 = vmatpush1.msra.mxu0 %v616
  %631 = vmatprep.subr.mxu0 0.0
  %632 = vmatpush1.msra.mxu0 %v615
  %633 = vmatprep.subr.mxu0 0.0
  %634 = vmatpush1.msra.mxu0 %v614
  %635 = vmatprep.subr.mxu0 0.0
  %636 = vmatpush1.msra.mxu0 %v613
  %637 = vmatprep.subr.mxu0 0.0
  %638 = vmatpush1.msra.mxu0 %v612
  %639 = vmatprep.subr.mxu0 0.0
  %640 = vmatpush1.msra.mxu0 %v611
  %641 = vmatprep.subr.mxu0 0.0
  %642 = vmatpush1.msra.mxu0 %v610
  %643 = vmatprep.subr.mxu0 0.0
  %644 = vmatpush1.msra.mxu0 %v609
  %645 = vmatprep.subr.mxu0 0.0
  %646 = vmatpush1.msra.mxu0 %v608
  %647 = vmatprep.subr.mxu0 0.0
  %648 = vmatpush1.msra.mxu0 %v607
  %649 = vmatprep.subr.mxu0 0.0
  %650 = vmatpush1.msra.mxu0 %v606
  %651 = vmatprep.subr.mxu0 0.0
  %652 = vmatpush1.msra.mxu0 %v605
  %653 = vmatprep.subr.mxu0 0.0
  %654 = vmatpush2.msra.mxu0 0.0
  %655 = vmatprep.subr.mxu0 0.0
  %656 = vmatpush2.msra.mxu0 0.0
  %657 = vmatprep.subr.mxu0 0.0
  %658 = vmatpush2.msra.mxu0 0.0
  %659 = vmatprep.subr.mxu0 0.0
  %660 = vmatpush2.msra.mxu0 0.0
  %661 = vmatprep.subr.mxu0 0.0
  %662 = vmatpush2.msra.mxu0 0.0
  %663 = vmatprep.subr.mxu0 0.0
  %664 = vmatpush2.msra.mxu0 0.0
  %665 = vmatprep.subr.mxu0 0.0
  %666 = vmatpush2.msra.mxu0 0.0
  %667 = vmatprep.subr.mxu0 0.0
  %668 = vmatpush2.msra.mxu0 0.0
  %669 = vmatprep.subr.mxu0 0.0
  %670 = vmatpush2.msra.mxu0 0.0
  %671 = vmatprep.subr.mxu0 0.0
  %672 = vmatpush2.msra.mxu0 0.0
  %673 = vmatprep.subr.mxu0 0.0
  %674 = vmatpush2.msra.mxu0 0.0
  %675 = vmatprep.subr.mxu0 0.0
  %676 = vmatpush2.msra.mxu0 0.0
  %677 = vmatprep.subr.mxu0 0.0
  %678 = vmatpush2.msra.mxu0 0.0
  %679 = vmatprep.subr.mxu0 0.0
  %680 = vmatpush2.msra.mxu0 0.0
  %681 = vmatprep.subr.mxu0 0.0
  %682 = vmatpush2.msra.mxu0 0.0
  %683 = vmatprep.subr.mxu0 0.0
  %684 = vmatpush2.msra.mxu0 0.0
  %685 = vmatprep.mubr.f32.mxu0 0.0
  %686 = vmatmul.mubr.f32.gmra.mxu0 %v366
  %v687 = vpop.f32.mrf.mxu0
  %v688 = vadd.f32 0.0, %v687
  %v689 = vpop.f32.mrf.mxu0
  %690 = vdwg.mxu0
  %v691 = vmul.f32 %v688, 0.001953125
  %v692 = vmul.f32 %v691, %v691
  %v694 = vrot.slane %v692, 7
  %v696 = vsub.f32 %v691, %v694
  %v697 = vmax.f32 %v696, 0.0
  %v698 = vadd.f32 %v697, 1e-05
  %v699 = vrsqrt.pop %v698
  %v701 = vrot.slane %v699, 1
  %v703 = vmul.f32 %v79, %v701
  %v704 = vmul.f32 %v691, %v703
  %v705 = vsub.f32 %v80, %v704
  %vm706 = vcmp.lt.s32.totalorder %v380, 0
  %v707 = vsub.s32 0, %v380
  %v708 = vsel %vm706, %v707, %v380
  %v709 = vshrl.u32 %v708, 3
  %v710 = vand.u32 %v708, 7
  %v711 = vsub.s32 0, %v710
  %v712 = vsel %vm706, %v711, %v710
  %vm713 = vcmp.ne.s32.totalorder %v712, 0
  %vm714 = vcmp.lt.s32.totalorder %v712, 0
  %vm715 = vmand %vm714, %vm713
  %v716 = vadd.s32 %v712, 8
  %v717 = vsel %vm715, %v716, %v712
  %vm718 = vcmp.eq.s32.totalorder %v717, %v19
  %v719 = vsel %vm718, 1, 0
  %v720 = vcvt.s32.f32 %v719
  %v722 = vrot.slane %v705, 7
  %v724 = vsel %vm282, %v703, %v722
  %vm725 = vcmask 64512
  %v727 = vsel %vm725, %v724, 0
  %729 = vmatprep.subr.mxu0 0.0
  %730 = vmatpush1.msra.mxu0 0.0
  %731 = vmatprep.subr.mxu0 0.0
  %732 = vmatpush1.msra.mxu0 0.0
  %733 = vmatprep.subr.mxu0 0.0
  %734 = vmatpush1.msra.mxu0 0.0
  %735 = vmatprep.subr.mxu0 0.0
  %736 = vmatpush1.msra.mxu0 0.0
  %737 = vmatprep.subr.mxu0 0.0
  %738 = vmatpush1.msra.mxu0 0.0
  %739 = vmatprep.subr.mxu0 0.0
  %740 = vmatpush1.msra.mxu0 0.0
  %741 = vmatprep.subr.mxu0 0.0
  %742 = vmatpush1.msra.mxu0 0.0
  %743 = vmatprep.subr.mxu0 0.0
  %744 = vmatpush1.msra.mxu0 0.0
  %745 = vmatprep.subr.mxu0 0.0
  %746 = vmatpush1.msra.mxu0 0.0
  %747 = vmatprep.subr.mxu0 0.0
  %748 = vmatpush1.msra.mxu0 0.0
  %749 = vmatprep.subr.mxu0 0.0
  %750 = vmatpush1.msra.mxu0 0.0
  %751 = vmatprep.subr.mxu0 0.0
  %752 = vmatpush1.msra.mxu0 0.0
  %753 = vmatprep.subr.mxu0 0.0
  %754 = vmatpush1.msra.mxu0 0.0
  %755 = vmatprep.subr.mxu0 0.0
  %756 = vmatpush1.msra.mxu0 0.0
  %757 = vmatprep.subr.mxu0 0.0
  %758 = vmatpush1.msra.mxu0 0.0
  %759 = vmatprep.subr.mxu0 0.0
  %760 = vmatpush1.msra.mxu0 %v720
  %761 = vmatprep.subr.mxu0 0.0
  %762 = vmatpush2.msra.mxu0 0.0
  %763 = vmatprep.subr.mxu0 0.0
  %764 = vmatpush2.msra.mxu0 0.0
  %765 = vmatprep.subr.mxu0 0.0
  %766 = vmatpush2.msra.mxu0 0.0
  %767 = vmatprep.subr.mxu0 0.0
  %768 = vmatpush2.msra.mxu0 0.0
  %769 = vmatprep.subr.mxu0 0.0
  %770 = vmatpush2.msra.mxu0 0.0
  %771 = vmatprep.subr.mxu0 0.0
  %772 = vmatpush2.msra.mxu0 0.0
  %773 = vmatprep.subr.mxu0 0.0
  %774 = vmatpush2.msra.mxu0 0.0
  %775 = vmatprep.subr.mxu0 0.0
  %776 = vmatpush2.msra.mxu0 0.0
  %777 = vmatprep.subr.mxu0 0.0
  %778 = vmatpush2.msra.mxu0 0.0
  %779 = vmatprep.subr.mxu0 0.0
  %780 = vmatpush2.msra.mxu0 0.0
  %781 = vmatprep.subr.mxu0 0.0
  %782 = vmatpush2.msra.mxu0 0.0
  %783 = vmatprep.subr.mxu0 0.0
  %784 = vmatpush2.msra.mxu0 0.0
  %785 = vmatprep.subr.mxu0 0.0
  %786 = vmatpush2.msra.mxu0 0.0
  %787 = vmatprep.subr.mxu0 0.0
  %788 = vmatpush2.msra.mxu0 0.0
  %789 = vmatprep.subr.mxu0 0.0
  %790 = vmatpush2.msra.mxu0 0.0
  %791 = vmatprep.subr.mxu0 0.0
  %792 = vmatpush2.msra.mxu0 0.0
  %793 = vmatprep.mubr.f32.mxu0 0.0
  %794 = vmatmul.mubr.f32.gmra.mxu0 %v727
  %v795 = vpop.f32.mrf.mxu0
  %v796 = vadd.f32 0.0, %v795
  %v797 = vpop.f32.mrf.mxu0
  %798 = vdwg.mxu0
  %v799 = vlaneseq
  %v800 = vshrl.u32 %v799, 7
  %v801 = vsub.s32 0, %v800
  %v802 = vrot.slane %v796, %v801
  %v803 = vmul.f32 %v340, %v802
  %v804 = vmul.f32 %v341, %v802
  %v805 = vmul.f32 %v342, %v802
  %v806 = vmul.f32 %v343, %v802
  %v807 = vlaneseq
  %v808 = vshrl.u32 %v807, 7
  %v809 = vsub.s32 1, %v808
  %v810 = vrot.slane %v796, %v809
  %v811 = vadd.f32 %v803, %v810
  %v812 = vadd.f32 %v804, %v810
  %v813 = vadd.f32 %v805, %v810
  %v814 = vadd.f32 %v806, %v810
  %v815 = vmax.f32 %v811, 0.0
  %v816 = vmax.f32 %v812, 0.0
  %v817 = vmax.f32 %v813, 0.0
  %v818 = vmax.f32 %v814, 0.0
  %v819 = vpack.c.bf16 %v816, %v815
  %v820 = vpack.c.bf16 %v818, %v817
  %v821 = vld [vmem:[%s2] sm:$0xff]
  %v822 = vld [vmem:[%s2 + $0x8] sm:$0xf]
  %v823 = vld [vmem:[%s2 + $0xc] sm:$0xff]
  %v824 = vld [vmem:[%s2 + $0x14] sm:$0xf]
  %v825 = vld [vmem:[%s2 + $0x18] sm:$0xff]
  %v826 = vld [vmem:[%s2 + $0x20] sm:$0xf]
  %v827 = vld [vmem:[%s2 + $0x24] sm:$0xff]
  %v828 = vld [vmem:[%s2 + $0x2c] sm:$0xf]
  %v829 = vld [vmem:[%s2 + $0x30] sm:$0xff]
  %v830 = vld [vmem:[%s2 + $0x38] sm:$0xf]
  %v831 = vld [vmem:[%s2 + $0x3c] sm:$0xff]
  %v832 = vld [vmem:[%s2 + $0x44] sm:$0xf]
  %v833 = vld [vmem:[%s2 + $0x48] sm:$0xff]
  %v834 = vld [vmem:[%s2 + $0x50] sm:$0xf]
  %v835 = vld [vmem:[%s2 + $0x54] sm:$0xff]
  %v836 = vld [vmem:[%s2 + $0x5c] sm:$0xf]
  %v837 = vld [vmem:[%s2 + $0x60] sm:$0xff]
  %v838 = vld [vmem:[%s2 + $0x68] sm:$0xf]
  %v839 = vld [vmem:[%s2 + $0x6c] sm:$0xff]
  %v840 = vld [vmem:[%s2 + $0x74] sm:$0xf]
  %v841 = vld [vmem:[%s2 + $0x78] sm:$0xff]
  %v842 = vld [vmem:[%s2 + $0x80] sm:$0xf]
  %v843 = vld [vmem:[%s2 + $0x84] sm:$0xff]
  %v844 = vld [vmem:[%s2 + $0x8c] sm:$0xf]
  %v845 = vld [vmem:[%s2 + $0x90] sm:$0xff]
  %v846 = vld [vmem:[%s2 + $0x98] sm:$0xf]
  %v847 = vld [vmem:[%s2 + $0x9c] sm:$0xff]
  %v848 = vld [vmem:[%s2 + $0xa4] sm:$0xf]
  %v849 = vld [vmem:[%s2 + $0xa8] sm:$0xff]
  %v850 = vld [vmem:[%s2 + $0xb0] sm:$0xf]
  %v851 = vld [vmem:[%s2 + $0xb4] sm:$0xff]
  %v852 = vld [vmem:[%s2 + $0xbc] sm:$0xf]
  %v885 = vunpack.c.l.b16 %v821
  %v886 = vunpack.c.h.b16 %v821
  %v887 = vunpack.c.l.b16 %v822
  %v888 = vunpack.c.l.b16 %v823
  %v889 = vunpack.c.h.b16 %v823
  %v890 = vunpack.c.l.b16 %v824
  %v891 = vunpack.c.l.b16 %v825
  %v892 = vunpack.c.h.b16 %v825
  %v893 = vunpack.c.l.b16 %v826
  %v894 = vunpack.c.l.b16 %v827
  %v895 = vunpack.c.h.b16 %v827
  %v896 = vunpack.c.l.b16 %v828
  %v897 = vunpack.c.l.b16 %v829
  %v898 = vunpack.c.h.b16 %v829
  %v899 = vunpack.c.l.b16 %v830
  %v900 = vunpack.c.l.b16 %v831
  %v901 = vunpack.c.h.b16 %v831
  %v902 = vunpack.c.l.b16 %v832
  %v903 = vunpack.c.l.b16 %v833
  %v904 = vunpack.c.h.b16 %v833
  %v905 = vunpack.c.l.b16 %v834
  %v906 = vunpack.c.l.b16 %v835
  %v907 = vunpack.c.h.b16 %v835
  %v908 = vunpack.c.l.b16 %v836
  %v909 = vunpack.c.l.b16 %v837
  %v910 = vunpack.c.h.b16 %v837
  %v911 = vunpack.c.l.b16 %v838
  %v912 = vunpack.c.l.b16 %v839
  %v913 = vunpack.c.h.b16 %v839
  %v914 = vunpack.c.l.b16 %v840
  %v915 = vunpack.c.l.b16 %v841
  %v916 = vunpack.c.h.b16 %v841
  %v917 = vunpack.c.l.b16 %v842
  %v918 = vunpack.c.l.b16 %v843
  %v919 = vunpack.c.h.b16 %v843
  %v920 = vunpack.c.l.b16 %v844
  %v921 = vunpack.c.l.b16 %v845
  %v922 = vunpack.c.h.b16 %v845
  %v923 = vunpack.c.l.b16 %v846
  %v924 = vunpack.c.l.b16 %v847
  %v925 = vunpack.c.h.b16 %v847
  %v926 = vunpack.c.l.b16 %v848
  %v927 = vunpack.c.l.b16 %v849
  %v928 = vunpack.c.h.b16 %v849
  %v929 = vunpack.c.l.b16 %v850
  %v930 = vunpack.c.l.b16 %v851
  %v931 = vunpack.c.h.b16 %v851
  %v932 = vunpack.c.l.b16 %v852
  %v933 = vpack.c.b16 %v888, %v885
  %v934 = vpack.c.b16 %v889, %v886
  %v935 = vpack.c.b16 %v890, %v887
  %v936 = vpack.c.b16 %v894, %v891
  %v937 = vpack.c.b16 %v895, %v892
  %v938 = vpack.c.b16 %v896, %v893
  %v939 = vpack.c.b16 %v900, %v897
  %v940 = vpack.c.b16 %v901, %v898
  %v941 = vpack.c.b16 %v902, %v899
  %v942 = vpack.c.b16 %v906, %v903
  %v943 = vpack.c.b16 %v907, %v904
  %v944 = vpack.c.b16 %v908, %v905
  %v945 = vpack.c.b16 %v912, %v909
  %v946 = vpack.c.b16 %v913, %v910
  %v947 = vpack.c.b16 %v914, %v911
  %v948 = vpack.c.b16 %v918, %v915
  %v949 = vpack.c.b16 %v919, %v916
  %v950 = vpack.c.b16 %v920, %v917
  %v951 = vpack.c.b16 %v924, %v921
  %v952 = vpack.c.b16 %v925, %v922
  %v953 = vpack.c.b16 %v926, %v923
  %v954 = vpack.c.b16 %v930, %v927
  %v955 = vpack.c.b16 %v931, %v928
  %v956 = vpack.c.b16 %v932, %v929
  %981 = vmatprep.subr.bf16.mxu0 %v955
  %982 = vmatpush1.bf16.msra.mxu0 %v954
  %983 = vmatprep.subr.bf16.mxu0 %v952
  %984 = vmatpush1.bf16.msra.mxu0 %v951
  %985 = vmatprep.subr.bf16.mxu0 %v949
  %986 = vmatpush1.bf16.msra.mxu0 %v948
  %987 = vmatprep.subr.bf16.mxu0 %v946
  %988 = vmatpush1.bf16.msra.mxu0 %v945
  %989 = vmatprep.subr.bf16.mxu0 %v943
  %990 = vmatpush1.bf16.msra.mxu0 %v942
  %991 = vmatprep.subr.bf16.mxu0 %v940
  %992 = vmatpush1.bf16.msra.mxu0 %v939
  %993 = vmatprep.subr.bf16.mxu0 %v937
  %994 = vmatpush1.bf16.msra.mxu0 %v936
  %995 = vmatprep.subr.bf16.mxu0 %v934
  %996 = vmatpush1.bf16.msra.mxu0 %v933
  %997 = vmatprep.subr.bf16.mxu0 0
  %998 = vmatpush2.bf16.msra.mxu0 0
  %999 = vmatprep.subr.bf16.mxu0 0
  %1000 = vmatpush2.bf16.msra.mxu0 0
  %1001 = vmatprep.subr.bf16.mxu0 0
  %1002 = vmatpush2.bf16.msra.mxu0 0
  %1003 = vmatprep.subr.bf16.mxu0 0
  %1004 = vmatpush2.bf16.msra.mxu0 0
  %1005 = vmatprep.subr.bf16.mxu0 0
  %1006 = vmatpush2.bf16.msra.mxu0 0
  %1007 = vmatprep.subr.bf16.mxu0 0
  %1008 = vmatpush2.bf16.msra.mxu0 0
  %1009 = vmatprep.subr.bf16.mxu0 0
  %1010 = vmatpush2.bf16.msra.mxu0 0
  %1011 = vmatprep.subr.bf16.mxu0 0
  %1012 = vmatpush2.bf16.msra.mxu0 0
  %1013 = vmatprep.mubr.bf16.mxu0 0
  %1014 = vmatmul.mubr.bf16.gmra.mxu0 %v819
  %v1015 = vpop.f32.mrf.mxu0
  %v1016 = vadd.f32 0.0, %v1015
  %v1017 = vpop.f32.mrf.mxu0
  %v1018 = vadd.f32 0.0, %v1017
  %v1019 = vpop.f32.mrf.mxu0
  %v1020 = vadd.f32 0.0, %v1019
  %v1021 = vpop.f32.mrf.mxu0
  %v1022 = vadd.f32 0.0, %v1021
  %1023 = vmatprep.mubr.bf16.mxu0 0
  %1024 = vmatmul.mubr.bf16.gmra.mxu0 %v820
  %v1025 = vpop.f32.mrf.mxu0
  %v1026 = vadd.f32 0.0, %v1025
  %v1027 = vpop.f32.mrf.mxu0
  %v1028 = vadd.f32 0.0, %v1027
  %v1029 = vpop.f32.mrf.mxu0
  %v1030 = vadd.f32 0.0, %v1029
  %v1031 = vpop.f32.mrf.mxu0
  %v1032 = vadd.f32 0.0, %v1031
  %1033 = vdwg.mxu0
  %1034 = vmatprep.subr.bf16.mxu0 0
  %1035 = vmatpush1.bf16.msra.mxu0 %v956
  %1036 = vmatprep.subr.bf16.mxu0 0
  %1037 = vmatpush1.bf16.msra.mxu0 %v953
  %1038 = vmatprep.subr.bf16.mxu0 0
  %1039 = vmatpush1.bf16.msra.mxu0 %v950
  %1040 = vmatprep.subr.bf16.mxu0 0
  %1041 = vmatpush1.bf16.msra.mxu0 %v947
  %1042 = vmatprep.subr.bf16.mxu0 0
  %1043 = vmatpush1.bf16.msra.mxu0 %v944
  %1044 = vmatprep.subr.bf16.mxu0 0
  %1045 = vmatpush1.bf16.msra.mxu0 %v941
  %1046 = vmatprep.subr.bf16.mxu0 0
  %1047 = vmatpush1.bf16.msra.mxu0 %v938
  %1048 = vmatprep.subr.bf16.mxu0 0
  %1049 = vmatpush1.bf16.msra.mxu0 %v935
  %1050 = vmatprep.subr.bf16.mxu0 0
  %1051 = vmatpush2.bf16.msra.mxu0 0
  %1052 = vmatprep.subr.bf16.mxu0 0
  %1053 = vmatpush2.bf16.msra.mxu0 0
  %1054 = vmatprep.subr.bf16.mxu0 0
  %1055 = vmatpush2.bf16.msra.mxu0 0
  %1056 = vmatprep.subr.bf16.mxu0 0
  %1057 = vmatpush2.bf16.msra.mxu0 0
  %1058 = vmatprep.subr.bf16.mxu0 0
  %1059 = vmatpush2.bf16.msra.mxu0 0
  %1060 = vmatprep.subr.bf16.mxu0 0
  %1061 = vmatpush2.bf16.msra.mxu0 0
  %1062 = vmatprep.subr.bf16.mxu0 0
  %1063 = vmatpush2.bf16.msra.mxu0 0
  %1064 = vmatprep.subr.bf16.mxu0 0
  %1065 = vmatpush2.bf16.msra.mxu0 0
  %1066 = vmatprep.mubr.bf16.mxu0 0
  %1067 = vmatmul.mubr.bf16.gmra.mxu0 %v819
  %v1068 = vpop.f32.mrf.mxu0
  %v1069 = vadd.f32 0.0, %v1068
  %v1070 = vpop.f32.mrf.mxu0
  %v1071 = vpop.f32.mrf.mxu0
  %v1072 = vadd.f32 0.0, %v1071
  %v1073 = vpop.f32.mrf.mxu0
  %1074 = vmatprep.mubr.bf16.mxu0 0
  %1075 = vmatmul.mubr.bf16.gmra.mxu0 %v820
  %v1076 = vpop.f32.mrf.mxu0
  %v1077 = vadd.f32 0.0, %v1076
  %v1078 = vpop.f32.mrf.mxu0
  %v1079 = vpop.f32.mrf.mxu0
  %v1080 = vadd.f32 0.0, %v1079
  %v1081 = vpop.f32.mrf.mxu0
  %1082 = vdwg.mxu0
  %v1087 = vrot.slane %v1016, 7
  %v1088 = vrot.slane %v1020, 7
  %v1089 = vsel %vm282, %v1087, %v1088
  %v1090 = vrot.slane %v1026, 7
  %v1091 = vsel %vm282, %v1088, %v1090
  %v1092 = vrot.slane %v1030, 7
  %v1093 = vsel %vm282, %v1090, %v1092
  %v1098 = vsel %vm282, 0.0, %v1087
  %v1103 = vrot.slane %v1069, 1
  %v1104 = vrot.slane %v1072, 1
  %v1105 = vsel %vm299, %v1103, %v1104
  %v1106 = vrot.slane %v1077, 1
  %v1107 = vsel %vm299, %v1104, %v1106
  %v1108 = vrot.slane %v1080, 1
  %v1109 = vsel %vm299, %v1106, %v1108
  %v1114 = vsel %vm299, %v1108, 0.0
  %v1115 = vsel %vm316, 0.0, %v1098
  %v1116 = vsel %vm317, 0.0, %v1089
  %v1117 = vsel %vm318, 0.0, %v1091
  %v1118 = vsel %vm319, 0.0, %v1093
  %v1119 = vadd.f32 %v1018, %v1115
  %v1120 = vadd.f32 %v1022, %v1116
  %v1121 = vadd.f32 %v1028, %v1117
  %v1122 = vadd.f32 %v1032, %v1118
  %v1123 = vsel %vm332, 0.0, %v1105
  %v1124 = vsel %vm333, 0.0, %v1107
  %v1125 = vsel %vm334, 0.0, %v1109
  %v1126 = vsel %vm335, 0.0, %v1114
  %v1127 = vadd.f32 %v1119, %v1123
  %v1128 = vadd.f32 %v1120, %v1124
  %v1129 = vadd.f32 %v1121, %v1125
  %v1130 = vadd.f32 %v1122, %v1126
  %v1131 = vadd.f32 %v1127, %v1128
  %v1132 = vadd.f32 %v1131, %v1129
  %v1133 = vadd.f32 %v1132, %v1130
  %v1134 = vrot.slane %v1133, 4
  %v1135 = vadd.f32 %v1133, %v1134
  %v1136 = vrot.slane %v1135, 2
  %v1137 = vadd.f32 %v1135, %v1136
  %v1138 = vrot.slane %v1137, 1
  %v1139 = vadd.f32 %v1137, %v1138
  %v1140 = vmul.f32 %v1127, %v1127
  %v1141 = vmul.f32 %v1128, %v1128
  %v1142 = vmul.f32 %v1129, %v1129
  %v1143 = vmul.f32 %v1130, %v1130
  %v1144 = vadd.f32 %v1140, %v1141
  %v1145 = vadd.f32 %v1144, %v1142
  %v1146 = vadd.f32 %v1145, %v1143
  %v1147 = vrot.slane %v1146, 4
  %v1148 = vadd.f32 %v1146, %v1147
  %v1149 = vrot.slane %v1148, 2
  %v1150 = vadd.f32 %v1148, %v1149
  %v1151 = vrot.slane %v1150, 1
  %v1152 = vadd.f32 %v1150, %v1151
  %v1153 = vsel %vm282, %v1139, %v1152
  %1154 = vmatprep.subr.mxu0 0.0
  %1155 = vmatpush1.msra.mxu0 %v620
  %1156 = vmatprep.subr.mxu0 0.0
  %1157 = vmatpush1.msra.mxu0 %v619
  %1158 = vmatprep.subr.mxu0 0.0
  %1159 = vmatpush1.msra.mxu0 %v618
  %1160 = vmatprep.subr.mxu0 0.0
  %1161 = vmatpush1.msra.mxu0 %v617
  %1162 = vmatprep.subr.mxu0 0.0
  %1163 = vmatpush1.msra.mxu0 %v616
  %1164 = vmatprep.subr.mxu0 0.0
  %1165 = vmatpush1.msra.mxu0 %v615
  %1166 = vmatprep.subr.mxu0 0.0
  %1167 = vmatpush1.msra.mxu0 %v614
  %1168 = vmatprep.subr.mxu0 0.0
  %1169 = vmatpush1.msra.mxu0 %v613
  %1170 = vmatprep.subr.mxu0 0.0
  %1171 = vmatpush1.msra.mxu0 %v612
  %1172 = vmatprep.subr.mxu0 0.0
  %1173 = vmatpush1.msra.mxu0 %v611
  %1174 = vmatprep.subr.mxu0 0.0
  %1175 = vmatpush1.msra.mxu0 %v610
  %1176 = vmatprep.subr.mxu0 0.0
  %1177 = vmatpush1.msra.mxu0 %v609
  %1178 = vmatprep.subr.mxu0 0.0
  %1179 = vmatpush1.msra.mxu0 %v608
  %1180 = vmatprep.subr.mxu0 0.0
  %1181 = vmatpush1.msra.mxu0 %v607
  %1182 = vmatprep.subr.mxu0 0.0
  %1183 = vmatpush1.msra.mxu0 %v606
  %1184 = vmatprep.subr.mxu0 0.0
  %1185 = vmatpush1.msra.mxu0 %v605
  %1186 = vmatprep.subr.mxu0 0.0
  %1187 = vmatpush2.msra.mxu0 0.0
  %1188 = vmatprep.subr.mxu0 0.0
  %1189 = vmatpush2.msra.mxu0 0.0
  %1190 = vmatprep.subr.mxu0 0.0
  %1191 = vmatpush2.msra.mxu0 0.0
  %1192 = vmatprep.subr.mxu0 0.0
  %1193 = vmatpush2.msra.mxu0 0.0
  %1194 = vmatprep.subr.mxu0 0.0
  %1195 = vmatpush2.msra.mxu0 0.0
  %1196 = vmatprep.subr.mxu0 0.0
  %1197 = vmatpush2.msra.mxu0 0.0
  %1198 = vmatprep.subr.mxu0 0.0
  %1199 = vmatpush2.msra.mxu0 0.0
  %1200 = vmatprep.subr.mxu0 0.0
  %1201 = vmatpush2.msra.mxu0 0.0
  %1202 = vmatprep.subr.mxu0 0.0
  %1203 = vmatpush2.msra.mxu0 0.0
  %1204 = vmatprep.subr.mxu0 0.0
  %1205 = vmatpush2.msra.mxu0 0.0
  %1206 = vmatprep.subr.mxu0 0.0
  %1207 = vmatpush2.msra.mxu0 0.0
  %1208 = vmatprep.subr.mxu0 0.0
  %1209 = vmatpush2.msra.mxu0 0.0
  %1210 = vmatprep.subr.mxu0 0.0
  %1211 = vmatpush2.msra.mxu0 0.0
  %1212 = vmatprep.subr.mxu0 0.0
  %1213 = vmatpush2.msra.mxu0 0.0
  %1214 = vmatprep.subr.mxu0 0.0
  %1215 = vmatpush2.msra.mxu0 0.0
  %1216 = vmatprep.subr.mxu0 0.0
  %1217 = vmatpush2.msra.mxu0 0.0
  %1218 = vmatprep.mubr.f32.mxu0 0.0
  %1219 = vmatmul.mubr.f32.gmra.mxu0 %v1153
  %v1220 = vpop.f32.mrf.mxu0
  %v1221 = vadd.f32 0.0, %v1220
  %v1222 = vpop.f32.mrf.mxu0
  %1223 = vdwg.mxu0
  %v1224 = vmul.f32 %v1221, 0.001953125
  %v1225 = vmul.f32 %v1224, %v1224
  %v1227 = vrot.slane %v1225, 7
  %v1229 = vsub.f32 %v1224, %v1227
  %v1230 = vmax.f32 %v1229, 0.0
  %v1231 = vadd.f32 %v1230, 1e-05
  %v1232 = vrsqrt.pop %v1231
  %v1234 = vrot.slane %v1232, 1
  %v1236 = vmul.f32 %v81, %v1234
  %v1237 = vmul.f32 %v1224, %v1236
  %v1238 = vsub.f32 %v82, %v1237
  %v1240 = vrot.slane %v1238, 7
  %v1242 = vsel %vm282, %v1236, %v1240
  %v1244 = vsel %vm725, %v1242, 0
  %1246 = vmatprep.subr.mxu0 0.0
  %1247 = vmatpush1.msra.mxu0 0.0
  %1248 = vmatprep.subr.mxu0 0.0
  %1249 = vmatpush1.msra.mxu0 0.0
  %1250 = vmatprep.subr.mxu0 0.0
  %1251 = vmatpush1.msra.mxu0 0.0
  %1252 = vmatprep.subr.mxu0 0.0
  %1253 = vmatpush1.msra.mxu0 0.0
  %1254 = vmatprep.subr.mxu0 0.0
  %1255 = vmatpush1.msra.mxu0 0.0
  %1256 = vmatprep.subr.mxu0 0.0
  %1257 = vmatpush1.msra.mxu0 0.0
  %1258 = vmatprep.subr.mxu0 0.0
  %1259 = vmatpush1.msra.mxu0 0.0
  %1260 = vmatprep.subr.mxu0 0.0
  %1261 = vmatpush1.msra.mxu0 0.0
  %1262 = vmatprep.subr.mxu0 0.0
  %1263 = vmatpush1.msra.mxu0 0.0
  %1264 = vmatprep.subr.mxu0 0.0
  %1265 = vmatpush1.msra.mxu0 0.0
  %1266 = vmatprep.subr.mxu0 0.0
  %1267 = vmatpush1.msra.mxu0 0.0
  %1268 = vmatprep.subr.mxu0 0.0
  %1269 = vmatpush1.msra.mxu0 0.0
  %1270 = vmatprep.subr.mxu0 0.0
  %1271 = vmatpush1.msra.mxu0 0.0
  %1272 = vmatprep.subr.mxu0 0.0
  %1273 = vmatpush1.msra.mxu0 0.0
  %1274 = vmatprep.subr.mxu0 0.0
  %1275 = vmatpush1.msra.mxu0 0.0
  %1276 = vmatprep.subr.mxu0 0.0
  %1277 = vmatpush1.msra.mxu0 %v720
  %1278 = vmatprep.subr.mxu0 0.0
  %1279 = vmatpush2.msra.mxu0 0.0
  %1280 = vmatprep.subr.mxu0 0.0
  %1281 = vmatpush2.msra.mxu0 0.0
  %1282 = vmatprep.subr.mxu0 0.0
  %1283 = vmatpush2.msra.mxu0 0.0
  %1284 = vmatprep.subr.mxu0 0.0
  %1285 = vmatpush2.msra.mxu0 0.0
  %1286 = vmatprep.subr.mxu0 0.0
  %1287 = vmatpush2.msra.mxu0 0.0
  %1288 = vmatprep.subr.mxu0 0.0
  %1289 = vmatpush2.msra.mxu0 0.0
  %1290 = vmatprep.subr.mxu0 0.0
  %1291 = vmatpush2.msra.mxu0 0.0
  %1292 = vmatprep.subr.mxu0 0.0
  %1293 = vmatpush2.msra.mxu0 0.0
  %1294 = vmatprep.subr.mxu0 0.0
  %1295 = vmatpush2.msra.mxu0 0.0
  %1296 = vmatprep.subr.mxu0 0.0
  %1297 = vmatpush2.msra.mxu0 0.0
  %1298 = vmatprep.subr.mxu0 0.0
  %1299 = vmatpush2.msra.mxu0 0.0
  %1300 = vmatprep.subr.mxu0 0.0
  %1301 = vmatpush2.msra.mxu0 0.0
  %1302 = vmatprep.subr.mxu0 0.0
  %1303 = vmatpush2.msra.mxu0 0.0
  %1304 = vmatprep.subr.mxu0 0.0
  %1305 = vmatpush2.msra.mxu0 0.0
  %1306 = vmatprep.subr.mxu0 0.0
  %1307 = vmatpush2.msra.mxu0 0.0
  %1308 = vmatprep.subr.mxu0 0.0
  %1309 = vmatpush2.msra.mxu0 0.0
  %1310 = vmatprep.mubr.f32.mxu0 0.0
  %1311 = vmatmul.mubr.f32.gmra.mxu0 %v1244
  %v1312 = vpop.f32.mrf.mxu0
  %v1313 = vadd.f32 0.0, %v1312
  %v1314 = vpop.f32.mrf.mxu0
  %1315 = vdwg.mxu0
  %v1316 = vlaneseq
  %v1317 = vshrl.u32 %v1316, 7
  %v1318 = vsub.s32 0, %v1317
  %v1319 = vrot.slane %v1313, %v1318
  %v1320 = vmul.f32 %v1127, %v1319
  %v1321 = vmul.f32 %v1128, %v1319
  %v1322 = vmul.f32 %v1129, %v1319
  %v1323 = vmul.f32 %v1130, %v1319
  %v1324 = vlaneseq
  %v1325 = vshrl.u32 %v1324, 7
  %v1326 = vsub.s32 1, %v1325
  %v1327 = vrot.slane %v1313, %v1326
  %v1328 = vadd.f32 %v1320, %v1327
  %v1329 = vadd.f32 %v1321, %v1327
  %v1330 = vadd.f32 %v1322, %v1327
  %v1331 = vadd.f32 %v1323, %v1327
  %v1332 = vmax.f32 %v1328, 0.0
  %v1333 = vmax.f32 %v1329, 0.0
  %v1334 = vmax.f32 %v1330, 0.0
  %v1335 = vmax.f32 %v1331, 0.0
  %1336 = vst [vmem:[%s4] sm:$0xff] %v1332
  %1337 = vst [vmem:[%s4 + $0x8] sm:$0xff] %v1333
  %1338 = vst [vmem:[%s4 + $0x10] sm:$0xff] %v1334
  %1339 = vst [vmem:[%s4 + $0x18] sm:$0xff] %v1335
  // Predicated region
  $region18: #{double_conv.1} parent=0 // pred_check
    _
  $region19: #{double_conv.1} parent=0 // pred_check_branch
    %1341 = sbr.rel (0) target = $region21
  $region20: #{double_conv.1} parent=0 // pred_region
    _
  $region21: #{double_conv.1} parent=0 // pred_fallthru
    _
  // Predicated region
  $region22: #{double_conv.1} parent=0 // pred_check
    _
  $region23: #{double_conv.1} parent=0 // pred_check_branch
    %1343 = sbr.rel (0) target = $region25
  $region24: #{double_conv.1} parent=0 // pred_region
    _
  $region25: #{double_conv.1} parent=0 // pred_fallthru
    _

</llo_original>
